<compile_context>
chip_gen: v5e
topology: v5e:2x2
jax: 0.10.0
libtpu: 0.0.40
codegen_flags: <defaults>
</compile_context>

<pallas_src>
import functools

import jax
import jax.numpy as jnp
from jax import lax
from jax.experimental import pallas as pl
from jax.experimental.pallas import tpu as pltpu


# ----------------------------- Pallas kernels ------------------------------

def _conv_caps_kernel(w_ref, b_ref, p_ref, o_ref):
    # w_ref: (Cout, Kd)    conv weight flattened in (cin, kh, kw) order
    # b_ref: (Cout, 1)     conv bias
    # p_ref: (Kd, T_HW)    im2col patches for one batch / spatial tile
    # o_ref: (Cout, T_HW)  conv output, already in NCHW (channel-major) order
    acc = jnp.dot(w_ref[...], p_ref[...], preferred_element_type=jnp.float32)
    o_ref[...] = (acc + b_ref[...]).astype(o_ref.dtype)


def _squash_kernel(x_ref, o_ref):
    # x_ref / o_ref: (T_R, D) — each row is one capsule vector of length D.
    x = x_ref[...].astype(jnp.float32)
    sn = jnp.sum(x * x, axis=-1, keepdims=True)               # (T_R, 1)
    scale = sn / (1.0 + sn)
    inv = pl.reciprocal(jnp.sqrt(sn) + 1e-8, approx=False)    # EUP, exact
    o_ref[...] = (scale * x * inv).astype(o_ref.dtype)


# ------------------------------ host wrappers -------------------------------

def conv_caps_pallas(x, weight, bias, stride):
    """x: (B, Cin, H, W); weight: (Cout, Cin, K, K); bias: (Cout,)
    Returns conv output as (B, Cout, Ho*Wo) — i.e. NCHW flatten order."""
    B, Cin, H, W = x.shape
    Cout, _, K, _ = weight.shape
    Ho = (H - K) // stride + 1
    Wo = (W - K) // stride + 1
    HW = Ho * Wo
    Kd = Cin * K * K

    # Single fused op replaces the former 49-iteration Python im2col.
    # Output channels are ordered (cin, kh, kw) -> matches weight.reshape(Cout, Kd).
    patches = lax.conv_general_dilated_patches(
        x, (K, K), (stride, stride), "VALID",
        dimension_numbers=("NCHW", "OIHW", "NCHW"),
        precision=lax.Precision.HIGHEST)                    # (B, Kd, Ho, Wo), exact copies
    patches = patches.reshape(B, Kd, HW)                    # free reshape (no transpose)

    w2d = weight.reshape(Cout, Kd)                          # free reshape
    b2d = bias.reshape(Cout, 1)

    # Spatial tile: whole extent at capsule-net sizes, 512-lane tiles beyond,
    # so per-step VMEM stays fixed as H/W grow.
    t_hw = HW if HW <= 512 else 512
    grid = (B, pl.cdiv(HW, t_hw))

    out = pl.pallas_call(
        _conv_caps_kernel,
        out_shape=jax.ShapeDtypeStruct((B, Cout, HW), jnp.float32),
        grid=grid,
        in_specs=[
            pl.BlockSpec((Cout, Kd), lambda b, j: (0, 0)),          # VMEM-resident weight
            pl.BlockSpec((Cout, 1), lambda b, j: (0, 0)),           # VMEM-resident bias
            pl.BlockSpec((None, Kd, t_hw), lambda b, j: (b, 0, j)), # per-batch/tile patches
        ],
        out_specs=pl.BlockSpec((None, Cout, t_hw), lambda b, j: (b, 0, j)),
        compiler_params=pltpu.CompilerParams(
            dimension_semantics=("parallel", "parallel")),
    )(w2d, b2d, patches)
    return out                                               # (B, Cout, HW)


def squash_pallas(caps):
    """caps: (B, N, D) -> squash along last dim, same shape."""
    B, N, D = caps.shape
    t_r = N if N <= 2048 else 2048
    grid = (B, pl.cdiv(N, t_r))
    return pl.pallas_call(
        _squash_kernel,
        out_shape=jax.ShapeDtypeStruct((B, N, D), jnp.float32),
        grid=grid,
        in_specs=[pl.BlockSpec((None, t_r, D), lambda b, j: (b, j, 0))],
        out_specs=pl.BlockSpec((None, t_r, D), lambda b, j: (b, j, 0)),
        compiler_params=pltpu.CompilerParams(
            dimension_semantics=("parallel", "parallel")),
    )(caps)


def primary_caps_forward(x, weight, bias, stride, out_channels):
    """Exact semantics of PrimaryCaps.forward (PyTorch, NCHW)."""
    conv_out = conv_caps_pallas(x, weight, bias, stride)     # (B, Cout, Ho*Wo), NCHW order
    B = conv_out.shape[0]
    # PyTorch .contiguous().view(B, -1, out_channels): conv_out is already in
    # NCHW flatten order, so this regroup is a pure metadata reshape (no copy).
    caps = conv_out.reshape(B, -1, out_channels)
    return squash_pallas(caps)


# ------------------------------- reference ----------------------------------

def _ref_forward(x, weight, bias, stride, out_channels):
    conv = lax.conv_general_dilated(
        x, weight, window_strides=(stride, stride), padding="VALID",
        dimension_numbers=("NCHW", "OIHW", "NCHW"))
    conv = conv + bias.reshape(1, -1, 1, 1)
    B = conv.shape[0]
    v = conv.reshape(B, -1, out_channels)
    sn = jnp.sum(v * v, axis=-1, keepdims=True)
    return (sn / (1.0 + sn)) * v / (jnp.sqrt(sn) + 1e-8)


# --------------------------------- main --------------------------------------

if __name__ == "__main__":
    # Module config (small, consistent with PrimaryCaps):
    num_conv_units = 4
    in_channels = 4
    out_channels = 8          # capsule dimension
    kernel_size = 3
    stride = 2

    cout_total = out_channels * num_conv_units   # 32

    key = jax.random.PRNGKey(0)
    kx, kw, kb = jax.random.split(key, 3)

    x = jax.random.normal(kx, (2, in_channels, 16, 16), dtype=jnp.float32)
    weight = 0.1 * jax.random.normal(
        kw, (cout_total, in_channels, kernel_size, kernel_size), dtype=jnp.float32)
    bias = 0.1 * jax.random.normal(kb, (cout_total,), dtype=jnp.float32)

    fwd = jax.jit(functools.partial(
        primary_caps_forward, stride=stride, out_channels=out_channels))
    out = jax.block_until_ready(fwd(x, weight, bias))

    ref = _ref_forward(x, weight, bias, stride, out_channels)
    assert out.shape == ref.shape, (out.shape, ref.shape)
    assert jnp.allclose(out, ref, atol=1e-5, rtol=1e-5), float(jnp.max(jnp.abs(out - ref)))

    print("KERNEL_OK")
</pallas_src>

<mosaic_0001>
module attributes {stable_mosaic.version = 11 : i64} {
  func.func @_conv_caps_kernel(%arg0: i32, %arg1: i32, %arg2: memref<32x36xf32, #tpu.memory_space<vmem>>, %arg3: memref<32x1xf32, #tpu.memory_space<vmem>>, %arg4: memref<1x36x49xf32, #tpu.memory_space<vmem>>, %arg5: memref<1x32x49xf32, #tpu.memory_space<vmem>>) attributes {dimension_semantics = [#tpu.dimension_semantics<parallel>, #tpu.dimension_semantics<parallel>], iteration_bounds = array<i64: 2, 1>, scalar_prefetch = 0 : i64, scratch_operands = 0 : i64, tpu.core_type = #tpu.core_type<tc>, window_params = [{pipeline_mode = #tpu.pipeline_mode<synchronous>, transform_indices = @transform_0, window_bounds = array<i64: 32, 36>}, {pipeline_mode = #tpu.pipeline_mode<synchronous>, transform_indices = @transform_1, window_bounds = array<i64: 32, 1>}, {transform_indices = @transform_2, window_bounds = array<i64: 1, 36, 49>}, {transform_indices = @transform_3, window_bounds = array<i64: 1, 32, 49>}]} {
    %c0 = arith.constant 0 : index
    %c0_0 = arith.constant 0 : index
    %0 = vector.load %arg2[%c0, %c0_0] : memref<32x36xf32, #tpu.memory_space<vmem>>, vector<32x36xf32>
    %c0_1 = arith.constant 0 : index
    %c0_2 = arith.constant 0 : index
    %c0_3 = arith.constant 0 : index
    %1 = vector.load %arg4[%c0_1, %c0_2, %c0_3] : memref<1x36x49xf32, #tpu.memory_space<vmem>>, vector<1x36x49xf32>
    %2 = vector.shape_cast %1 : vector<1x36x49xf32> to vector<36x49xf32>
    %cst = arith.constant dense<0.000000e+00> : vector<32x49xf32>
    %3 = tpu.matmul %0, %2, %cst {dimension_numbers = #tpu.dot_dimension_numbers<[1], [0], [0], [1], [0, 0, 1, 1], [], []>} : vector<32x36xf32>, vector<36x49xf32>, vector<32x49xf32> -> vector<32x49xf32>
    %c0_4 = arith.constant 0 : index
    %c0_5 = arith.constant 0 : index
    %4 = vector.load %arg3[%c0_4, %c0_5] : memref<32x1xf32, #tpu.memory_space<vmem>>, vector<32x1xf32>
    %5 = vector.broadcast %4 : vector<32x1xf32> to vector<32x49xf32>
    %6 = arith.addf %3, %5 : vector<32x49xf32>
    %c0_6 = arith.constant 0 : index
    %c0_7 = arith.constant 0 : index
    %c0_8 = arith.constant 0 : index
    %7 = vector.load %arg5[%c0_6, %c0_7, %c0_8] : memref<1x32x49xf32, #tpu.memory_space<vmem>>, vector<1x32x49xf32>
    %8 = vector.shape_cast %7 : vector<1x32x49xf32> to vector<32x49xf32>
    %9 = vector.shape_cast %6 : vector<32x49xf32> to vector<1x32x49xf32>
    tpu.vector_store %arg5[%c0_6, %c0_7, %c0_8], %9 {strides = array<i32>} : memref<1x32x49xf32, #tpu.memory_space<vmem>>, vector<1x32x49xf32>,
    return
  }
  func.func @transform_0(%arg0: i32, %arg1: i32) -> (i32, i32) {
    %c0_i32 = arith.constant 0 : i32
    %c0_i32_0 = arith.constant 0 : i32
    %c0_i32_1 = arith.constant 0 : i32
    return %c0_i32, %c0_i32_0 : i32, i32
  }
  func.func @transform_1(%arg0: i32, %arg1: i32) -> (i32, i32) {
    %c0_i32 = arith.constant 0 : i32
    %c0_i32_0 = arith.constant 0 : i32
    %c0_i32_1 = arith.constant 0 : i32
    return %c0_i32, %c0_i32_0 : i32, i32
  }
  func.func @transform_2(%arg0: i32, %arg1: i32) -> (i32, i32, i32) {
    %c0_i32 = arith.constant 0 : i32
    %c0_i32_0 = arith.constant 0 : i32
    return %arg0, %c0_i32, %arg1 : i32, i32, i32
  }
  func.func @transform_3(%arg0: i32, %arg1: i32) -> (i32, i32, i32) {
    %c0_i32 = arith.constant 0 : i32
    %c0_i32_0 = arith.constant 0 : i32
    return %arg0, %c0_i32, %arg1 : i32, i32, i32
  }
}

module attributes {stable_mosaic.version = 11 : i64} {
  func.func @_squash_kernel(%arg0: i32, %arg1: i32, %arg2: memref<1x196x8xf32, #tpu.memory_space<vmem>>, %arg3: memref<1x196x8xf32, #tpu.memory_space<vmem>>) attributes {dimension_semantics = [#tpu.dimension_semantics<parallel>, #tpu.dimension_semantics<parallel>], iteration_bounds = array<i64: 2, 1>, scalar_prefetch = 0 : i64, scratch_operands = 0 : i64, tpu.core_type = #tpu.core_type<tc>, window_params = [{transform_indices = @transform_0, window_bounds = array<i64: 1, 196, 8>}, {transform_indices = @transform_1, window_bounds = array<i64: 1, 196, 8>}]} {
    %c0 = arith.constant 0 : index
    %c0_0 = arith.constant 0 : index
    %c0_1 = arith.constant 0 : index
    %0 = vector.load %arg2[%c0, %c0_0, %c0_1] : memref<1x196x8xf32, #tpu.memory_space<vmem>>, vector<1x196x8xf32>
    %1 = vector.shape_cast %0 : vector<1x196x8xf32> to vector<196x8xf32>
    %2 = arith.mulf %1, %1 : vector<196x8xf32>
    %cst = arith.constant dense<0.000000e+00> : vector<196xf32>
    %3 = vector.multi_reduction <add>, %2, %cst [1] : vector<196x8xf32> to vector<196xf32>
    %4 = vector.shape_cast %3 : vector<196xf32> to vector<196x1xf32>
    %cst_2 = arith.constant 1.000000e+00 : f32
    %5 = vector.broadcast %cst_2 : f32 to vector<196x1xf32>
    %6 = arith.addf %5, %4 : vector<196x1xf32>
    %7 = arith.divf %4, %6 : vector<196x1xf32>
    %8 = math.sqrt %4 : vector<196x1xf32>
    %cst_3 = arith.constant 9.99999993E-9 : f32
    %9 = vector.broadcast %cst_3 : f32 to vector<196x1xf32>
    %10 = arith.addf %8, %9 : vector<196x1xf32>
    %11 = tpu.reciprocal %10 : vector<196x1xf32> -> vector<196x1xf32>
    %12 = vector.broadcast %7 : vector<196x1xf32> to vector<196x8xf32>
    %13 = arith.mulf %12, %1 : vector<196x8xf32>
    %14 = vector.broadcast %11 : vector<196x1xf32> to vector<196x8xf32>
    %15 = arith.mulf %13, %14 : vector<196x8xf32>
    %c0_4 = arith.constant 0 : index
    %c0_5 = arith.constant 0 : index
    %c0_6 = arith.constant 0 : index
    %16 = vector.load %arg3[%c0_4, %c0_5, %c0_6] : memref<1x196x8xf32, #tpu.memory_space<vmem>>, vector<1x196x8xf32>
    %17 = vector.shape_cast %16 : vector<1x196x8xf32> to vector<196x8xf32>
    %18 = vector.shape_cast %15 : vector<196x8xf32> to vector<1x196x8xf32>
    tpu.vector_store %arg3[%c0_4, %c0_5, %c0_6], %18 {strides = array<i32>} : memref<1x196x8xf32, #tpu.memory_space<vmem>>, vector<1x196x8xf32>,
    return
  }
  func.func @transform_0(%arg0: i32, %arg1: i32) -> (i32, i32, i32) {
    %c0_i32 = arith.constant 0 : i32
    %c0_i32_0 = arith.constant 0 : i32
    return %arg0, %arg1, %c0_i32 : i32, i32, i32
  }
  func.func @transform_1(%arg0: i32, %arg1: i32) -> (i32, i32, i32) {
    %c0_i32 = arith.constant 0 : i32
    %c0_i32_0 = arith.constant 0 : i32
    return %arg0, %arg1, %c0_i32 : i32, i32, i32
  }
}

</mosaic_0001>

<llo_original>
// kernel: primary_caps_forward.2
$region0: #{primary_caps_forward.2}
  #allocation0 [shape = 'u32[]', space=smem, size = 0x4, offset = 0x4, fixed_abs, tag = 'smem constant byte address 0x4 - core index']
  #allocation1 [shape = 'u32[72,128]{1,0:T(1,128)}', space=vmem, size = 0x9000, scoped, tag = 'internal scratch']
  %s0 = inlined_call_operand.vmem [shape: f32[32,36], index: 0, kind: input, shape index: {}]
  %s1 = inlined_call_operand.vmem [shape: f32[32,1], index: 1, kind: input, shape index: {}]
  %s2 = inlined_call_operand.vmem [shape: f32[2,36,49], index: 2, kind: input, shape index: {}]
  %s3 = inlined_call_operand.vmem [shape: f32[2,32,49], index: 3, kind: output, shape index: {}]
  %s4 = sld [smem:[#allocation0]]
  $region45: #{primary_caps_forward.2} parent=0
    _
  %s6 = ssub.s32 1, %s4
  %s7 = scalar_select 0, %s6, %s4
  loop: start=0, step=1, limit=4
  $region2: #{primary_caps_forward.2} parent=0 // loop_pre_header
    _
  $region3: #{primary_caps_forward.2} parent=0 // loop_header
    %s9 = sphi 0, %s13
    %p10 = scmp.ge.s32.totalorder %s9, 4
    %s16 = sphi 0, %s28
    %s17 = sphi 0, %s24
    %s18 = sphi 0, %s16
    %s19 = sphi 0, %s17
    %s20 = sphi 0, %s18
    %s21 = sphi 0, %s19
    %s29 = sphi 0, %s29
    %s31 = sphi 0, %s29
    %s32 = sphi 0, %s31
    %s46 = sphi 0, %s32
    %s50 = sphi 0, %s50
    %s52 = sphi 0, %s50
    %s53 = sphi 0, %s52
    %s67 = sphi 0, %s53
    %s75 = sphi 0, %s77
    %s78 = sphi 0, %s75
    %s79 = sphi 0, %s78
    %s95 = sphi 0, %s79
    %s103 = sphi 0, %s105
    %s106 = sphi 0, %s103
    %s107 = sphi 0, %s106
    %s123 = sphi 0, %s107
  $region4: #{primary_caps_forward.2} parent=0 // loop_header_branch
    %12 = sbr.rel (%p10) target = $region8
  $region5: #{primary_caps_forward.2} parent=0 // loop_body
    %s14 = ssub.s32 %s9, 1
    %s15 = ssub.s32 %s9, 2
    %s22 = sadd.s32 1, %s17
    %p23 = scmp.ge.s32.totalorder %s22, 1
    %s24 = scalar_select %p23, 0, %s22
    %s25 = sadd.s32 1, %s16
    %s26 = scalar_select %p23, %s25, %s16
    %p27 = scmp.ge.s32.totalorder %s26, 2
    %s28 = scalar_select %p27, 0, %s26
    %s30 = sadd.s32 %s29, 1
    %p33 = scmp.eq.s32.totalorder %s9, 1
    %p34 = scmp.ne.s32.totalorder %s29, %s31
    %p35 = scmp.eq.s32.totalorder %s9, 0
    %p36 = por %p34, %p35
    %p37 = scmp.ne.s32.totalorder %s29, %s31
    %p38 = scmp.eq.s32.totalorder %s14, 1
    %p39 = por %p37, %p38
    %p40 = scmp.ne.s32.totalorder %s31, %s32
    %p41 = scmp.eq.s32.totalorder %s14, 0
    %p42 = por %p40, %p41
    %p43 = scmp.ne.s32.totalorder %s31, %s32
    %p44 = scmp.eq.s32.totalorder %s15, 1
    %p45 = por %p43, %p44
    %p47 = scmp.ne.s32.totalorder %s32, %s46
    %p48 = scmp.eq.s32.totalorder %s15, 0
    %p49 = por %p47, %p48
    %s51 = sadd.s32 %s50, 1
    %p54 = scmp.eq.s32.totalorder %s9, 1
    %p55 = scmp.ne.s32.totalorder %s50, %s52
    %p56 = scmp.eq.s32.totalorder %s9, 0
    %p57 = por %p55, %p56
    %p58 = scmp.ne.s32.totalorder %s50, %s52
    %p59 = scmp.eq.s32.totalorder %s14, 1
    %p60 = por %p58, %p59
    %p61 = scmp.ne.s32.totalorder %s52, %s53
    %p62 = scmp.eq.s32.totalorder %s14, 0
    %p63 = por %p61, %p62
    %p64 = scmp.ne.s32.totalorder %s52, %s53
    %p65 = scmp.eq.s32.totalorder %s15, 1
    %p66 = por %p64, %p65
    %p68 = scmp.ne.s32.totalorder %s53, %s67
    %p69 = scmp.eq.s32.totalorder %s15, 0
    %p70 = por %p68, %p69
    %s71 = ssub.s32 %s16, %s28
    %s72 = ssub.s32 %s17, %s24
    %s73 = sor.u32 %s71, %s72
    %p74 = scmp.eq.s32.totalorder %s73, 0
    %s76 = sadd.s32 %s75, 1
    %s77 = scalar_select %p74, %s75, %s76
    %p80 = pneg %p74
    %p81 = scmp.eq.s32.totalorder %s9, 1
    %p82 = por %p80, %p81
    %p83 = scmp.ne.s32.totalorder %s75, %s78
    %p84 = scmp.eq.s32.totalorder %s9, 0
    %p85 = por %p83, %p84
    %p86 = scmp.ne.s32.totalorder %s75, %s78
    %p87 = scmp.eq.s32.totalorder %s14, 1
    %p88 = por %p86, %p87
    %p89 = scmp.ne.s32.totalorder %s78, %s79
    %p90 = scmp.eq.s32.totalorder %s14, 0
    %p91 = por %p89, %p90
    %p92 = scmp.ne.s32.totalorder %s78, %s79
    %p93 = scmp.eq.s32.totalorder %s15, 1
    %p94 = por %p92, %p93
    %p96 = scmp.ne.s32.totalorder %s79, %s95
    %p97 = scmp.eq.s32.totalorder %s15, 0
    %p98 = por %p96, %p97
    %s99 = ssub.s32 %s16, %s28
    %s100 = ssub.s32 %s17, %s24
    %s101 = sor.u32 %s99, %s100
    %p102 = scmp.eq.s32.totalorder %s101, 0
    %s104 = sadd.s32 %s103, 1
    %s105 = scalar_select %p102, %s103, %s104
    %p108 = pneg %p102
    %p109 = scmp.eq.s32.totalorder %s9, 1
    %p110 = por %p108, %p109
    %p111 = scmp.ne.s32.totalorder %s103, %s106
    %p112 = scmp.eq.s32.totalorder %s9, 0
    %p113 = por %p111, %p112
    %p114 = scmp.ne.s32.totalorder %s103, %s106
    %p115 = scmp.eq.s32.totalorder %s14, 1
    %p116 = por %p114, %p115
    %p117 = scmp.ne.s32.totalorder %s106, %s107
    %p118 = scmp.eq.s32.totalorder %s14, 0
    %p119 = por %p117, %p118
    %p120 = scmp.ne.s32.totalorder %s106, %s107
    %p121 = scmp.eq.s32.totalorder %s15, 1
    %p122 = por %p120, %p121
    %p124 = scmp.ne.s32.totalorder %s107, %s123
    %p125 = scmp.eq.s32.totalorder %s15, 0
    %p126 = por %p124, %p125
    %p127 = scmp.le.s32.totalorder 1, %s9
    %p128 = scmp.lt.s32.totalorder %s9, 3
    %p129 = pnand %p127, %p128
    %p130 = pneg %p129
    // Predicated region
    $region9: #{primary_caps_forward.2} parent=5 // pred_check
      _
    $region10: #{primary_caps_forward.2} parent=5 // pred_check_branch
      %132 = sbr.rel (%p129) target = $region12
    $region11: #{primary_caps_forward.2} parent=5 // pred_region
      %s133 = ssub.s32 %s9, 1
      // Predicated region
      $region13: #{primary_caps_forward.2} parent=11 // pred_check
        %p134 = pneg %p42
      $region14: #{primary_caps_forward.2} parent=11 // pred_check_branch
        %136 = sbr.rel (%p134) target = $region16
      $region15: #{primary_caps_forward.2} parent=11 // pred_region
        _
      $region16: #{primary_caps_forward.2} parent=11 // pred_fallthru
        _
      // Predicated region
      $region17: #{primary_caps_forward.2} parent=11 // pred_check
        %p137 = pneg %p63
      $region18: #{primary_caps_forward.2} parent=11 // pred_check_branch
        %139 = sbr.rel (%p137) target = $region20
      $region19: #{primary_caps_forward.2} parent=11 // pred_region
        _
      $region20: #{primary_caps_forward.2} parent=11 // pred_fallthru
        _
    $region12: #{primary_caps_forward.2} parent=5 // pred_fallthru
      _
    %p140 = scmp.lt.s32.totalorder %s9, 2
    // Predicated region
    $region21: #{primary_caps_forward.2} parent=5 // pred_check
      %p141 = pneg %p140
    $region22: #{primary_caps_forward.2} parent=5 // pred_check_branch
      %143 = sbr.rel (%p141) target = $region24
    $region23: #{primary_caps_forward.2} parent=5 // pred_region
      // Predicated region
      $region25: #{primary_caps_forward.2} parent=23 // pred_check
        %p144 = pneg %p85
      $region26: #{primary_caps_forward.2} parent=23 // pred_check_branch
        %146 = sbr.rel (%p144) target = $region28
      $region27: #{primary_caps_forward.2} parent=23 // pred_region
        %p147 = scmp.lt.s32.totalorder %s16, 1
        %s148 = scalar_select %p147, %s16, 1
        %p149 = scmp.lt.s32.totalorder %s17, 0
        %s150 = scalar_select %p149, %s17, 0
        %s151 = smul.addr %s148, 5
        %s152 = sadd.s32 %s150, %s151
        %s153 = smul.addr %s152, 8
        %s154 = scalar_lea.vmem %s2, %s153
      $region28: #{primary_caps_forward.2} parent=23 // pred_fallthru
        _
    $region24: #{primary_caps_forward.2} parent=5 // pred_fallthru
      _
    %p155 = scmp.le.s32.totalorder 1, %s9
    %p156 = scmp.lt.s32.totalorder %s9, 3
    %p157 = pnand %p155, %p156
    %p158 = pneg %p157
    // Predicated region
    $region29: #{primary_caps_forward.2} parent=5 // pred_check
      _
    $region30: #{primary_caps_forward.2} parent=5 // pred_check_branch
      %160 = sbr.rel (%p157) target = $region32
    $region31: #{primary_caps_forward.2} parent=5 // pred_region
      %s161 = ssub.s32 %s9, 1
      %p162 = pneg %p42
      %p163 = pneg %p39
      %p164 = pneg %p63
      %p165 = pneg %p60
      %p166 = scmp.lt.s32.totalorder %s18, 1
      %s167 = scalar_select %p166, %s18, 1
      %p168 = scmp.lt.s32.totalorder %s19, 0
      %s169 = scalar_select %p168, %s19, 0
      %s170 = smul.addr %s167, 5
      %s171 = sadd.s32 %s169, %s170
      %s172 = smul.addr %s171, 8
      %s173 = scalar_lea.vmem %s2, %s172
      %p174 = pneg %p91
      %p175 = pneg %p88
      %p176 = pneg %p119
      %p177 = pneg %p116
      %p178 = scmp.lt.s32.totalorder %s18, 1
      %s179 = scalar_select %p178, %s18, 1
      %p180 = scmp.lt.s32.totalorder %s19, 0
      %s181 = scalar_select %p180, %s19, 0
      %s182 = smul.addr %s179, 4
      %s183 = sadd.s32 %s181, %s182
      %s184 = smul.addr %s183, 8
      %s185 = scalar_lea.vmem %s3, %s184
      %p186 = scmp.lt.s32.totalorder %s18, 1
      %s187 = scalar_select %p186, %s18, 1
      %p188 = scmp.lt.s32.totalorder %s19, 0
      %s189 = scalar_select %p188, %s19, 0
      %s190 = smul.addr %s187, 5
      %s191 = sadd.s32 %s189, %s190
      %s192 = smul.addr %s191, 8
      %s193 = scalar_lea.vmem %s2, %s192
      %p194 = scmp.lt.s32.totalorder %s18, 1
      %s195 = scalar_select %p194, %s18, 1
      %p196 = scmp.lt.s32.totalorder %s19, 0
      %s197 = scalar_select %p196, %s19, 0
      %s198 = smul.addr %s195, 4
      %s199 = sadd.s32 %s197, %s198
      %s200 = smul.addr %s199, 8
      %s201 = scalar_lea.vmem %s3, %s200
      %v202 = vld [vmem:[%s0] sm:$0xff]
      %v203 = vld [vmem:[%s0 + $0x8] sm:$0xff]
      %v204 = vld [vmem:[%s0 + $0x10] sm:$0xff]
      %v205 = vld [vmem:[%s0 + $0x18] sm:$0xff]
      %v206 = vld [vmem:[%s193] sm:$0xff]
      %v207 = vld [vmem:[%s193 + $0x8] sm:$0xff]
      %v208 = vld [vmem:[%s193 + $0x10] sm:$0xff]
      %v209 = vld [vmem:[%s193 + $0x18] sm:$0xff]
      %v210 = vld [vmem:[%s193 + $0x20] sm:$0xf]
      %v211 = vld [vmem:[%s1] sm:$0xff]
      %v212 = vld [vmem:[%s1 + $0x8] sm:$0xff]
      %v213 = vld [vmem:[%s1 + $0x10] sm:$0xff]
      %v214 = vld [vmem:[%s1 + $0x18] sm:$0xff]
      %216 = vset.pattern.permute.xlu0 0
      %217 = vperm.xlu0 %216, %v211
      %v218 = vpop.permute.xlu0 %217
      %221 = vset.pattern.permute.xlu0 0
      %222 = vperm.xlu0 %221, %v212
      %v223 = vpop.permute.xlu0 %222
      %226 = vset.pattern.permute.xlu0 0
      %227 = vperm.xlu0 %226, %v213
      %v228 = vpop.permute.xlu0 %227
      %231 = vset.pattern.permute.xlu0 0
      %232 = vperm.xlu0 %231, %v214
      %v233 = vpop.permute.xlu0 %232
      %vm235 = vcmask 293888
      %v237 = vsel %vm235, %v202, 0
      %v240 = vsel %vm235, %v203, 0
      %v243 = vsel %vm235, %v204, 0
      %v246 = vsel %vm235, %v205, 0
      %vm248 = vcmask 1043456
      %v250 = vsel %vm248, %v210, 0
      %252 = vmatpush.msra.mxu0 0.0
      %253 = vmatpush.msra.mxu0 0.0
      %254 = vmatpush.msra.mxu0 0.0
      %255 = vmatpush.msra.mxu0 0.0
      %256 = vmatpush.msra.mxu0 0.0
      %257 = vmatpush.msra.mxu0 0.0
      %258 = vmatpush.msra.mxu0 0.0
      %259 = vmatpush.msra.mxu0 0.0
      %260 = vmatpush.msra.mxu0 0.0
      %261 = vmatpush.msra.mxu0 0.0
      %262 = vmatpush.msra.mxu0 0.0
      %263 = vmatpush.msra.mxu0 %v250
      %264 = vmatpush.msra.mxu0 %v209
      %265 = vmatpush.msra.mxu0 %v208
      %266 = vmatpush.msra.mxu0 %v207
      %267 = vmatpush.msra.mxu0 %v206
      %268 = vmatmul.f32.gmra.mxu0 %v237
      %v269 = vpop.f32.mrf.mxu0
      %v270 = vadd.f32 %v218, %v269
      %271 = vmatmul.f32.gmra.mxu0 %v240
      %v272 = vpop.f32.mrf.mxu0
      %v273 = vadd.f32 %v223, %v272
      %274 = vmatmul.f32.gmra.mxu0 %v243
      %v275 = vpop.f32.mrf.mxu0
      %v276 = vadd.f32 %v228, %v275
      %277 = vmatmul.f32.gmra.mxu0 %v246
      %v278 = vpop.f32.mrf.mxu0
      %v279 = vadd.f32 %v233, %v278
      %280 = vdwg.mxu0
      %vm281 = vcmask 400384
      %282 = vst.msk [vmem:[%s201] sm:$0xff] %vm281, %v270
      %283 = vst.msk [vmem:[%s201 + $0x8] sm:$0xff] %vm281, %v273
      %284 = vst.msk [vmem:[%s201 + $0x10] sm:$0xff] %vm281, %v276
      %285 = vst.msk [vmem:[%s201 + $0x18] sm:$0xff] %vm281, %v279
      %p286 = scmp.lt.s32.totalorder %s18, 1
      %s287 = scalar_select %p286, %s18, 1
      %p288 = scmp.lt.s32.totalorder %s19, 0
      %s289 = scalar_select %p288, %s19, 0
      %s290 = smul.addr %s287, 4
      %s291 = sadd.s32 %s289, %s290
      %s292 = smul.addr %s291, 8
      %s293 = scalar_lea.vmem %s3, %s292
      // Predicated region
      $region33: #{primary_caps_forward.2} parent=31 // pred_check
        %p294 = pneg %p116
      $region34: #{primary_caps_forward.2} parent=31 // pred_check_branch
        %296 = sbr.rel (%p294) target = $region36
      $region35: #{primary_caps_forward.2} parent=31 // pred_region
        _
      $region36: #{primary_caps_forward.2} parent=31 // pred_fallthru
        _
    $region32: #{primary_caps_forward.2} parent=5 // pred_fallthru
      _
    %p297 = scmp.le.s32.totalorder 2, %s9
    // Predicated region
    $region37: #{primary_caps_forward.2} parent=5 // pred_check
      %p298 = pneg %p297
    $region38: #{primary_caps_forward.2} parent=5 // pred_check_branch
      %300 = sbr.rel (%p298) target = $region40
    $region39: #{primary_caps_forward.2} parent=5 // pred_region
      %s301 = ssub.s32 %s9, 2
      // Predicated region
      $region41: #{primary_caps_forward.2} parent=39 // pred_check
        %p302 = pneg %p122
      $region42: #{primary_caps_forward.2} parent=39 // pred_check_branch
        %304 = sbr.rel (%p302) target = $region44
      $region43: #{primary_caps_forward.2} parent=39 // pred_region
        %p305 = scmp.lt.s32.totalorder %s20, 1
        %s306 = scalar_select %p305, %s20, 1
        %p307 = scmp.lt.s32.totalorder %s21, 0
        %s308 = scalar_select %p307, %s21, 0
        %s309 = smul.addr %s306, 4
        %s310 = sadd.s32 %s308, %s309
        %s311 = smul.addr %s310, 8
        %s312 = scalar_lea.vmem %s3, %s311
      $region44: #{primary_caps_forward.2} parent=39 // pred_fallthru
        _
    $region40: #{primary_caps_forward.2} parent=5 // pred_fallthru
      _
  $region6: #{primary_caps_forward.2} parent=0 // loop_footer
    %s13 = sadd.s32 1, %s9
  $region7: #{primary_caps_forward.2} parent=0 // loop_footer_branch
    %8 = sbr.rel target = $region3
  $region8: #{primary_caps_forward.2} parent=0 // loop_exit
    _

// kernel: primary_caps_forward.3
$region0: #{primary_caps_forward.3}
  #allocation0 [shape = 'u32[]', space=smem, size = 0x4, offset = 0x4, fixed_abs, tag = 'smem constant byte address 0x4 - core index']
  #allocation1 [shape = 'u32[72,128]{1,0:T(1,128)}', space=vmem, size = 0x9000, scoped, tag = 'internal scratch']
  %s0 = inlined_call_operand.vmem [shape: f32[2,196,8], index: 0, kind: input, shape index: {}]
  %s1 = inlined_call_operand.vmem [shape: f32[2,196,8], index: 1, kind: output, shape index: {}]
  %s2 = sld [smem:[#allocation0]]
  $region37: #{primary_caps_forward.3} parent=0
    _
  %s4 = ssub.s32 1, %s2
  %s5 = scalar_select 0, %s4, %s2
  loop: start=0, step=1, limit=4
  $region2: #{primary_caps_forward.3} parent=0 // loop_pre_header
    _
  $region3: #{primary_caps_forward.3} parent=0 // loop_header
    %s7 = sphi 0, %s11
    %p8 = scmp.ge.s32.totalorder %s7, 4
    %s14 = sphi 0, %s26
    %s15 = sphi 0, %s22
    %s16 = sphi 0, %s14
    %s17 = sphi 0, %s15
    %s18 = sphi 0, %s16
    %s19 = sphi 0, %s17
    %s31 = sphi 0, %s33
    %s34 = sphi 0, %s31
    %s35 = sphi 0, %s34
    %s51 = sphi 0, %s35
    %s59 = sphi 0, %s61
    %s62 = sphi 0, %s59
    %s63 = sphi 0, %s62
    %s79 = sphi 0, %s63
  $region4: #{primary_caps_forward.3} parent=0 // loop_header_branch
    %10 = sbr.rel (%p8) target = $region8
  $region5: #{primary_caps_forward.3} parent=0 // loop_body
    %s12 = ssub.s32 %s7, 1
    %s13 = ssub.s32 %s7, 2
    %s20 = sadd.s32 1, %s15
    %p21 = scmp.ge.s32.totalorder %s20, 1
    %s22 = scalar_select %p21, 0, %s20
    %s23 = sadd.s32 1, %s14
    %s24 = scalar_select %p21, %s23, %s14
    %p25 = scmp.ge.s32.totalorder %s24, 2
    %s26 = scalar_select %p25, 0, %s24
    %s27 = ssub.s32 %s14, %s26
    %s28 = ssub.s32 %s15, %s22
    %s29 = sor.u32 %s27, %s28
    %p30 = scmp.eq.s32.totalorder %s29, 0
    %s32 = sadd.s32 %s31, 1
    %s33 = scalar_select %p30, %s31, %s32
    %p36 = pneg %p30
    %p37 = scmp.eq.s32.totalorder %s7, 1
    %p38 = por %p36, %p37
    %p39 = scmp.ne.s32.totalorder %s31, %s34
    %p40 = scmp.eq.s32.totalorder %s7, 0
    %p41 = por %p39, %p40
    %p42 = scmp.ne.s32.totalorder %s31, %s34
    %p43 = scmp.eq.s32.totalorder %s12, 1
    %p44 = por %p42, %p43
    %p45 = scmp.ne.s32.totalorder %s34, %s35
    %p46 = scmp.eq.s32.totalorder %s12, 0
    %p47 = por %p45, %p46
    %p48 = scmp.ne.s32.totalorder %s34, %s35
    %p49 = scmp.eq.s32.totalorder %s13, 1
    %p50 = por %p48, %p49
    %p52 = scmp.ne.s32.totalorder %s35, %s51
    %p53 = scmp.eq.s32.totalorder %s13, 0
    %p54 = por %p52, %p53
    %s55 = ssub.s32 %s14, %s26
    %s56 = ssub.s32 %s15, %s22
    %s57 = sor.u32 %s55, %s56
    %p58 = scmp.eq.s32.totalorder %s57, 0
    %s60 = sadd.s32 %s59, 1
    %s61 = scalar_select %p58, %s59, %s60
    %p64 = pneg %p58
    %p65 = scmp.eq.s32.totalorder %s7, 1
    %p66 = por %p64, %p65
    %p67 = scmp.ne.s32.totalorder %s59, %s62
    %p68 = scmp.eq.s32.totalorder %s7, 0
    %p69 = por %p67, %p68
    %p70 = scmp.ne.s32.totalorder %s59, %s62
    %p71 = scmp.eq.s32.totalorder %s12, 1
    %p72 = por %p70, %p71
    %p73 = scmp.ne.s32.totalorder %s62, %s63
    %p74 = scmp.eq.s32.totalorder %s12, 0
    %p75 = por %p73, %p74
    %p76 = scmp.ne.s32.totalorder %s62, %s63
    %p77 = scmp.eq.s32.totalorder %s13, 1
    %p78 = por %p76, %p77
    %p80 = scmp.ne.s32.totalorder %s63, %s79
    %p81 = scmp.eq.s32.totalorder %s13, 0
    %p82 = por %p80, %p81
    %p83 = scmp.le.s32.totalorder 1, %s7
    %p84 = scmp.lt.s32.totalorder %s7, 3
    %p85 = pnand %p83, %p84
    %p86 = pneg %p85
    // Predicated region
    $region9: #{primary_caps_forward.3} parent=5 // pred_check
      _
    $region10: #{primary_caps_forward.3} parent=5 // pred_check_branch
      %88 = sbr.rel (%p85) target = $region12
    $region11: #{primary_caps_forward.3} parent=5 // pred_region
      %s89 = ssub.s32 %s7, 1
    $region12: #{primary_caps_forward.3} parent=5 // pred_fallthru
      _
    %p90 = scmp.lt.s32.totalorder %s7, 2
    // Predicated region
    $region13: #{primary_caps_forward.3} parent=5 // pred_check
      %p91 = pneg %p90
    $region14: #{primary_caps_forward.3} parent=5 // pred_check_branch
      %93 = sbr.rel (%p91) target = $region16
    $region15: #{primary_caps_forward.3} parent=5 // pred_region
      // Predicated region
      $region17: #{primary_caps_forward.3} parent=15 // pred_check
        %p94 = pneg %p41
      $region18: #{primary_caps_forward.3} parent=15 // pred_check_branch
        %96 = sbr.rel (%p94) target = $region20
      $region19: #{primary_caps_forward.3} parent=15 // pred_region
        %s97 = smul.u32 25, %s15
        %p98 = scmp.lt.s32.totalorder %s14, 1
        %s99 = scalar_select %p98, %s14, 1
        %p100 = scmp.lt.s32.totalorder %s97, 24
        %s101 = scalar_select %p100, %s97, 24
        %s102 = smul.addr %s99, 25
        %s103 = sadd.s32 %s101, %s102
        %s104 = smul.addr %s103, 8
        %s105 = scalar_lea.vmem %s0, %s104
        %s106 = smul.u32 25, %s15
      $region20: #{primary_caps_forward.3} parent=15 // pred_fallthru
        _
    $region16: #{primary_caps_forward.3} parent=5 // pred_fallthru
      _
    %p107 = scmp.le.s32.totalorder 1, %s7
    %p108 = scmp.lt.s32.totalorder %s7, 3
    %p109 = pnand %p107, %p108
    %p110 = pneg %p109
    // Predicated region
    $region21: #{primary_caps_forward.3} parent=5 // pred_check
      _
    $region22: #{primary_caps_forward.3} parent=5 // pred_check_branch
      %112 = sbr.rel (%p109) target = $region24
    $region23: #{primary_caps_forward.3} parent=5 // pred_region
      %s113 = ssub.s32 %s7, 1
      %s114 = smul.u32 25, %s17
      %p115 = scmp.lt.s32.totalorder %s16, 1
      %s116 = scalar_select %p115, %s16, 1
      %p117 = scmp.lt.s32.totalorder %s114, 24
      %s118 = scalar_select %p117, %s114, 24
      %s119 = smul.addr %s116, 25
      %s120 = sadd.s32 %s118, %s119
      %s121 = smul.addr %s120, 8
      %s122 = scalar_lea.vmem %s0, %s121
      %p123 = pneg %p47
      %p124 = pneg %p44
      %p125 = pneg %p75
      %p126 = pneg %p72
      %s127 = smul.u32 25, %s17
      %p128 = scmp.lt.s32.totalorder %s16, 1
      %s129 = scalar_select %p128, %s16, 1
      %p130 = scmp.lt.s32.totalorder %s127, 24
      %s131 = scalar_select %p130, %s127, 24
      %s132 = smul.addr %s129, 25
      %s133 = sadd.s32 %s131, %s132
      %s134 = smul.addr %s133, 8
      %s135 = scalar_lea.vmem %s1, %s134
      %s136 = smul.u32 25, %s17
      %p137 = scmp.lt.s32.totalorder %s16, 1
      %s138 = scalar_select %p137, %s16, 1
      %p139 = scmp.lt.s32.totalorder %s136, 24
      %s140 = scalar_select %p139, %s136, 24
      %s141 = smul.addr %s138, 25
      %s142 = sadd.s32 %s140, %s141
      %s143 = smul.addr %s142, 8
      %s144 = scalar_lea.vmem %s0, %s143
      %s145 = smul.u32 25, %s17
      %s146 = smul.u32 25, %s17
      %p147 = scmp.lt.s32.totalorder %s16, 1
      %s148 = scalar_select %p147, %s16, 1
      %p149 = scmp.lt.s32.totalorder %s146, 24
      %s150 = scalar_select %p149, %s146, 24
      %s151 = smul.addr %s148, 25
      %s152 = sadd.s32 %s150, %s151
      %s153 = smul.addr %s152, 8
      %s154 = scalar_lea.vmem %s1, %s153
      %s155 = smul.u32 25, %s17
      %v156 = vld [vmem:[%s144] sm:$0xff]
      %v157 = vld [vmem:[%s144 + $0x8] sm:$0xff]
      %v158 = vld [vmem:[%s144 + $0x10] sm:$0xff]
      %v159 = vld [vmem:[%s144 + $0x18] sm:$0xff]
      %v160 = vld [vmem:[%s144 + $0x20] sm:$0xff]
      %v161 = vld [vmem:[%s144 + $0x28] sm:$0xff]
      %v162 = vld [vmem:[%s144 + $0x30] sm:$0xff]
      %v163 = vld [vmem:[%s144 + $0x38] sm:$0xff]
      %v164 = vld [vmem:[%s144 + $0x40] sm:$0xff]
      %v165 = vld [vmem:[%s144 + $0x48] sm:$0xff]
      %v166 = vld [vmem:[%s144 + $0x50] sm:$0xff]
      %v167 = vld [vmem:[%s144 + $0x58] sm:$0xff]
      %v168 = vld [vmem:[%s144 + $0x60] sm:$0xff]
      %v169 = vld [vmem:[%s144 + $0x68] sm:$0xff]
      %v170 = vld [vmem:[%s144 + $0x70] sm:$0xff]
      %v171 = vld [vmem:[%s144 + $0x78] sm:$0xff]
      %v172 = vld [vmem:[%s144 + $0x80] sm:$0xff]
      %v173 = vld [vmem:[%s144 + $0x88] sm:$0xff]
      %v174 = vld [vmem:[%s144 + $0x90] sm:$0xff]
      %v175 = vld [vmem:[%s144 + $0x98] sm:$0xff]
      %v176 = vld [vmem:[%s144 + $0xa0] sm:$0xff]
      %v177 = vld [vmem:[%s144 + $0xa8] sm:$0xff]
      %v178 = vld [vmem:[%s144 + $0xb0] sm:$0xff]
      %v179 = vld [vmem:[%s144 + $0xb8] sm:$0xff]
      %v180 = vld [vmem:[%s144 + $0xc0] sm:$0xf]
      %v181 = vmul.f32 %v156, %v156
      %v182 = vmul.f32 %v157, %v157
      %v183 = vmul.f32 %v158, %v158
      %v184 = vmul.f32 %v159, %v159
      %v185 = vmul.f32 %v160, %v160
      %v186 = vmul.f32 %v161, %v161
      %v187 = vmul.f32 %v162, %v162
      %v188 = vmul.f32 %v163, %v163
      %v189 = vmul.f32 %v164, %v164
      %v190 = vmul.f32 %v165, %v165
      %v191 = vmul.f32 %v166, %v166
      %v192 = vmul.f32 %v167, %v167
      %v193 = vmul.f32 %v168, %v168
      %v194 = vmul.f32 %v169, %v169
      %v195 = vmul.f32 %v170, %v170
      %v196 = vmul.f32 %v171, %v171
      %v197 = vmul.f32 %v172, %v172
      %v198 = vmul.f32 %v173, %v173
      %v199 = vmul.f32 %v174, %v174
      %v200 = vmul.f32 %v175, %v175
      %v201 = vmul.f32 %v176, %v176
      %v202 = vmul.f32 %v177, %v177
      %v203 = vmul.f32 %v178, %v178
      %v204 = vmul.f32 %v179, %v179
      %v205 = vmul.f32 %v180, %v180
      %vm206 = vcmask 64512
      %v207 = vsel %vm206, %v181, 0.0
      %208 = vadd.xlane.f32.xlu0 %v207
      %v209 = vpop.xlane.xlu0 %208
      %v210 = vsel %vm206, %v182, 0.0
      %211 = vadd.xlane.f32.xlu0 %v210
      %v212 = vpop.xlane.xlu0 %211
      %v213 = vsel %vm206, %v183, 0.0
      %214 = vadd.xlane.f32.xlu0 %v213
      %v215 = vpop.xlane.xlu0 %214
      %v216 = vsel %vm206, %v184, 0.0
      %217 = vadd.xlane.f32.xlu0 %v216
      %v218 = vpop.xlane.xlu0 %217
      %v219 = vsel %vm206, %v185, 0.0
      %220 = vadd.xlane.f32.xlu0 %v219
      %v221 = vpop.xlane.xlu0 %220
      %v222 = vsel %vm206, %v186, 0.0
      %223 = vadd.xlane.f32.xlu0 %v222
      %v224 = vpop.xlane.xlu0 %223
      %v225 = vsel %vm206, %v187, 0.0
      %226 = vadd.xlane.f32.xlu0 %v225
      %v227 = vpop.xlane.xlu0 %226
      %v228 = vsel %vm206, %v188, 0.0
      %229 = vadd.xlane.f32.xlu0 %v228
      %v230 = vpop.xlane.xlu0 %229
      %v231 = vsel %vm206, %v189, 0.0
      %232 = vadd.xlane.f32.xlu0 %v231
      %v233 = vpop.xlane.xlu0 %232
      %v234 = vsel %vm206, %v190, 0.0
      %235 = vadd.xlane.f32.xlu0 %v234
      %v236 = vpop.xlane.xlu0 %235
      %v237 = vsel %vm206, %v191, 0.0
      %238 = vadd.xlane.f32.xlu0 %v237
      %v239 = vpop.xlane.xlu0 %238
      %v240 = vsel %vm206, %v192, 0.0
      %241 = vadd.xlane.f32.xlu0 %v240
      %v242 = vpop.xlane.xlu0 %241
      %v243 = vsel %vm206, %v193, 0.0
      %244 = vadd.xlane.f32.xlu0 %v243
      %v245 = vpop.xlane.xlu0 %244
      %v246 = vsel %vm206, %v194, 0.0
      %247 = vadd.xlane.f32.xlu0 %v246
      %v248 = vpop.xlane.xlu0 %247
      %v249 = vsel %vm206, %v195, 0.0
      %250 = vadd.xlane.f32.xlu0 %v249
      %v251 = vpop.xlane.xlu0 %250
      %v252 = vsel %vm206, %v196, 0.0
      %253 = vadd.xlane.f32.xlu0 %v252
      %v254 = vpop.xlane.xlu0 %253
      %v255 = vsel %vm206, %v197, 0.0
      %256 = vadd.xlane.f32.xlu0 %v255
      %v257 = vpop.xlane.xlu0 %256
      %v258 = vsel %vm206, %v198, 0.0
      %259 = vadd.xlane.f32.xlu0 %v258
      %v260 = vpop.xlane.xlu0 %259
      %v261 = vsel %vm206, %v199, 0.0
      %262 = vadd.xlane.f32.xlu0 %v261
      %v263 = vpop.xlane.xlu0 %262
      %v264 = vsel %vm206, %v200, 0.0
      %265 = vadd.xlane.f32.xlu0 %v264
      %v266 = vpop.xlane.xlu0 %265
      %v267 = vsel %vm206, %v201, 0.0
      %268 = vadd.xlane.f32.xlu0 %v267
      %v269 = vpop.xlane.xlu0 %268
      %v270 = vsel %vm206, %v202, 0.0
      %271 = vadd.xlane.f32.xlu0 %v270
      %v272 = vpop.xlane.xlu0 %271
      %v273 = vsel %vm206, %v203, 0.0
      %274 = vadd.xlane.f32.xlu0 %v273
      %v275 = vpop.xlane.xlu0 %274
      %v276 = vsel %vm206, %v204, 0.0
      %277 = vadd.xlane.f32.xlu0 %v276
      %v278 = vpop.xlane.xlu0 %277
      %vm279 = vcmask 60416
      %v280 = vsel %vm279, %v205, 0.0
      %281 = vadd.xlane.f32.xlu0 %v280
      %v282 = vpop.xlane.xlu0 %281
      %v283 = vadd.f32 %v209, 1.0
      %v284 = vadd.f32 %v212, 1.0
      %v285 = vadd.f32 %v215, 1.0
      %v286 = vadd.f32 %v218, 1.0
      %v287 = vadd.f32 %v221, 1.0
      %v288 = vadd.f32 %v224, 1.0
      %v289 = vadd.f32 %v227, 1.0
      %v290 = vadd.f32 %v230, 1.0
      %v291 = vadd.f32 %v233, 1.0
      %v292 = vadd.f32 %v236, 1.0
      %v293 = vadd.f32 %v239, 1.0
      %v294 = vadd.f32 %v242, 1.0
      %v295 = vadd.f32 %v245, 1.0
      %v296 = vadd.f32 %v248, 1.0
      %v297 = vadd.f32 %v251, 1.0
      %v298 = vadd.f32 %v254, 1.0
      %v299 = vadd.f32 %v257, 1.0
      %v300 = vadd.f32 %v260, 1.0
      %v301 = vadd.f32 %v263, 1.0
      %v302 = vadd.f32 %v266, 1.0
      %v303 = vadd.f32 %v269, 1.0
      %v304 = vadd.f32 %v272, 1.0
      %v305 = vadd.f32 %v275, 1.0
      %v306 = vadd.f32 %v278, 1.0
      %v307 = vadd.f32 %v282, 1.0
      %v308 = vrcp.pop %v283
      %v309 = vmul.f32 %v283, %v308
      %v310 = vsub.f32 1.0, %v309
      %v311 = vmul.f32 %v308, %v310
      %v312 = vadd.f32 %v308, %v311
      %vm313 = vweird.f32 %v283
      %vm314 = vweird.f32 %v308
      %vm315 = vmor %vm313, %vm314
      %v316 = vsel %vm315, %v308, %v312
      %v317 = vand.u32 2147483647, %v283
      %vm318 = vcmp.eq.f32.partialorder %v317, 8.507059e+37
      %v319 = vand.u32 %v283, 2147483648
      %v320 = vor.u32 1.1754944e-38, %v319
      %v321 = vsel %vm318, %v320, %v316
      %v322 = vmul.f32 %v209, %v321
      %v323 = vrcp.pop %v284
      %v324 = vmul.f32 %v284, %v323
      %v325 = vsub.f32 1.0, %v324
      %v326 = vmul.f32 %v323, %v325
      %v327 = vadd.f32 %v323, %v326
      %vm328 = vweird.f32 %v284
      %vm329 = vweird.f32 %v323
      %vm330 = vmor %vm328, %vm329
      %v331 = vsel %vm330, %v323, %v327
      %v332 = vand.u32 2147483647, %v284
      %vm333 = vcmp.eq.f32.partialorder %v332, 8.507059e+37
      %v334 = vand.u32 %v284, 2147483648
      %v335 = vor.u32 1.1754944e-38, %v334
      %v336 = vsel %vm333, %v335, %v331
      %v337 = vmul.f32 %v212, %v336
      %v338 = vrcp.pop %v285
      %v339 = vmul.f32 %v285, %v338
      %v340 = vsub.f32 1.0, %v339
      %v341 = vmul.f32 %v338, %v340
      %v342 = vadd.f32 %v338, %v341
      %vm343 = vweird.f32 %v285
      %vm344 = vweird.f32 %v338
      %vm345 = vmor %vm343, %vm344
      %v346 = vsel %vm345, %v338, %v342
      %v347 = vand.u32 2147483647, %v285
      %vm348 = vcmp.eq.f32.partialorder %v347, 8.507059e+37
      %v349 = vand.u32 %v285, 2147483648
      %v350 = vor.u32 1.1754944e-38, %v349
      %v351 = vsel %vm348, %v350, %v346
      %v352 = vmul.f32 %v215, %v351
      %v353 = vrcp.pop %v286
      %v354 = vmul.f32 %v286, %v353
      %v355 = vsub.f32 1.0, %v354
      %v356 = vmul.f32 %v353, %v355
      %v357 = vadd.f32 %v353, %v356
      %vm358 = vweird.f32 %v286
      %vm359 = vweird.f32 %v353
      %vm360 = vmor %vm358, %vm359
      %v361 = vsel %vm360, %v353, %v357
      %v362 = vand.u32 2147483647, %v286
      %vm363 = vcmp.eq.f32.partialorder %v362, 8.507059e+37
      %v364 = vand.u32 %v286, 2147483648
      %v365 = vor.u32 1.1754944e-38, %v364
      %v366 = vsel %vm363, %v365, %v361
      %v367 = vmul.f32 %v218, %v366
      %v368 = vrcp.pop %v287
      %v369 = vmul.f32 %v287, %v368
      %v370 = vsub.f32 1.0, %v369
      %v371 = vmul.f32 %v368, %v370
      %v372 = vadd.f32 %v368, %v371
      %vm373 = vweird.f32 %v287
      %vm374 = vweird.f32 %v368
      %vm375 = vmor %vm373, %vm374
      %v376 = vsel %vm375, %v368, %v372
      %v377 = vand.u32 2147483647, %v287
      %vm378 = vcmp.eq.f32.partialorder %v377, 8.507059e+37
      %v379 = vand.u32 %v287, 2147483648
      %v380 = vor.u32 1.1754944e-38, %v379
      %v381 = vsel %vm378, %v380, %v376
      %v382 = vmul.f32 %v221, %v381
      %v383 = vrcp.pop %v288
      %v384 = vmul.f32 %v288, %v383
      %v385 = vsub.f32 1.0, %v384
      %v386 = vmul.f32 %v383, %v385
      %v387 = vadd.f32 %v383, %v386
      %vm388 = vweird.f32 %v288
      %vm389 = vweird.f32 %v383
      %vm390 = vmor %vm388, %vm389
      %v391 = vsel %vm390, %v383, %v387
      %v392 = vand.u32 2147483647, %v288
      %vm393 = vcmp.eq.f32.partialorder %v392, 8.507059e+37
      %v394 = vand.u32 %v288, 2147483648
      %v395 = vor.u32 1.1754944e-38, %v394
      %v396 = vsel %vm393, %v395, %v391
      %v397 = vmul.f32 %v224, %v396
      %v398 = vrcp.pop %v289
      %v399 = vmul.f32 %v289, %v398
      %v400 = vsub.f32 1.0, %v399
      %v401 = vmul.f32 %v398, %v400
      %v402 = vadd.f32 %v398, %v401
      %vm403 = vweird.f32 %v289
      %vm404 = vweird.f32 %v398
      %vm405 = vmor %vm403, %vm404
      %v406 = vsel %vm405, %v398, %v402
      %v407 = vand.u32 2147483647, %v289
      %vm408 = vcmp.eq.f32.partialorder %v407, 8.507059e+37
      %v409 = vand.u32 %v289, 2147483648
      %v410 = vor.u32 1.1754944e-38, %v409
      %v411 = vsel %vm408, %v410, %v406
      %v412 = vmul.f32 %v227, %v411
      %v413 = vrcp.pop %v290
      %v414 = vmul.f32 %v290, %v413
      %v415 = vsub.f32 1.0, %v414
      %v416 = vmul.f32 %v413, %v415
      %v417 = vadd.f32 %v413, %v416
      %vm418 = vweird.f32 %v290
      %vm419 = vweird.f32 %v413
      %vm420 = vmor %vm418, %vm419
      %v421 = vsel %vm420, %v413, %v417
      %v422 = vand.u32 2147483647, %v290
      %vm423 = vcmp.eq.f32.partialorder %v422, 8.507059e+37
      %v424 = vand.u32 %v290, 2147483648
      %v425 = vor.u32 1.1754944e-38, %v424
      %v426 = vsel %vm423, %v425, %v421
      %v427 = vmul.f32 %v230, %v426
      %v428 = vrcp.pop %v291
      %v429 = vmul.f32 %v291, %v428
      %v430 = vsub.f32 1.0, %v429
      %v431 = vmul.f32 %v428, %v430
      %v432 = vadd.f32 %v428, %v431
      %vm433 = vweird.f32 %v291
      %vm434 = vweird.f32 %v428
      %vm435 = vmor %vm433, %vm434
      %v436 = vsel %vm435, %v428, %v432
      %v437 = vand.u32 2147483647, %v291
      %vm438 = vcmp.eq.f32.partialorder %v437, 8.507059e+37
      %v439 = vand.u32 %v291, 2147483648
      %v440 = vor.u32 1.1754944e-38, %v439
      %v441 = vsel %vm438, %v440, %v436
      %v442 = vmul.f32 %v233, %v441
      %v443 = vrcp.pop %v292
      %v444 = vmul.f32 %v292, %v443
      %v445 = vsub.f32 1.0, %v444
      %v446 = vmul.f32 %v443, %v445
      %v447 = vadd.f32 %v443, %v446
      %vm448 = vweird.f32 %v292
      %vm449 = vweird.f32 %v443
      %vm450 = vmor %vm448, %vm449
      %v451 = vsel %vm450, %v443, %v447
      %v452 = vand.u32 2147483647, %v292
      %vm453 = vcmp.eq.f32.partialorder %v452, 8.507059e+37
      %v454 = vand.u32 %v292, 2147483648
      %v455 = vor.u32 1.1754944e-38, %v454
      %v456 = vsel %vm453, %v455, %v451
      %v457 = vmul.f32 %v236, %v456
      %v458 = vrcp.pop %v293
      %v459 = vmul.f32 %v293, %v458
      %v460 = vsub.f32 1.0, %v459
      %v461 = vmul.f32 %v458, %v460
      %v462 = vadd.f32 %v458, %v461
      %vm463 = vweird.f32 %v293
      %vm464 = vweird.f32 %v458
      %vm465 = vmor %vm463, %vm464
      %v466 = vsel %vm465, %v458, %v462
      %v467 = vand.u32 2147483647, %v293
      %vm468 = vcmp.eq.f32.partialorder %v467, 8.507059e+37
      %v469 = vand.u32 %v293, 2147483648
      %v470 = vor.u32 1.1754944e-38, %v469
      %v471 = vsel %vm468, %v470, %v466
      %v472 = vmul.f32 %v239, %v471
      %v473 = vrcp.pop %v294
      %v474 = vmul.f32 %v294, %v473
      %v475 = vsub.f32 1.0, %v474
      %v476 = vmul.f32 %v473, %v475
      %v477 = vadd.f32 %v473, %v476
      %vm478 = vweird.f32 %v294
      %vm479 = vweird.f32 %v473
      %vm480 = vmor %vm478, %vm479
      %v481 = vsel %vm480, %v473, %v477
      %v482 = vand.u32 2147483647, %v294
      %vm483 = vcmp.eq.f32.partialorder %v482, 8.507059e+37
      %v484 = vand.u32 %v294, 2147483648
      %v485 = vor.u32 1.1754944e-38, %v484
      %v486 = vsel %vm483, %v485, %v481
      %v487 = vmul.f32 %v242, %v486
      %v488 = vrcp.pop %v295
      %v489 = vmul.f32 %v295, %v488
      %v490 = vsub.f32 1.0, %v489
      %v491 = vmul.f32 %v488, %v490
      %v492 = vadd.f32 %v488, %v491
      %vm493 = vweird.f32 %v295
      %vm494 = vweird.f32 %v488
      %vm495 = vmor %vm493, %vm494
      %v496 = vsel %vm495, %v488, %v492
      %v497 = vand.u32 2147483647, %v295
      %vm498 = vcmp.eq.f32.partialorder %v497, 8.507059e+37
      %v499 = vand.u32 %v295, 2147483648
      %v500 = vor.u32 1.1754944e-38, %v499
      %v501 = vsel %vm498, %v500, %v496
      %v502 = vmul.f32 %v245, %v501
      %v503 = vrcp.pop %v296
      %v504 = vmul.f32 %v296, %v503
      %v505 = vsub.f32 1.0, %v504
      %v506 = vmul.f32 %v503, %v505
      %v507 = vadd.f32 %v503, %v506
      %vm508 = vweird.f32 %v296
      %vm509 = vweird.f32 %v503
      %vm510 = vmor %vm508, %vm509
      %v511 = vsel %vm510, %v503, %v507
      %v512 = vand.u32 2147483647, %v296
      %vm513 = vcmp.eq.f32.partialorder %v512, 8.507059e+37
      %v514 = vand.u32 %v296, 2147483648
      %v515 = vor.u32 1.1754944e-38, %v514
      %v516 = vsel %vm513, %v515, %v511
      %v517 = vmul.f32 %v248, %v516
      %v518 = vrcp.pop %v297
      %v519 = vmul.f32 %v297, %v518
      %v520 = vsub.f32 1.0, %v519
      %v521 = vmul.f32 %v518, %v520
      %v522 = vadd.f32 %v518, %v521
      %vm523 = vweird.f32 %v297
      %vm524 = vweird.f32 %v518
      %vm525 = vmor %vm523, %vm524
      %v526 = vsel %vm525, %v518, %v522
      %v527 = vand.u32 2147483647, %v297
      %vm528 = vcmp.eq.f32.partialorder %v527, 8.507059e+37
      %v529 = vand.u32 %v297, 2147483648
      %v530 = vor.u32 1.1754944e-38, %v529
      %v531 = vsel %vm528, %v530, %v526
      %v532 = vmul.f32 %v251, %v531
      %v533 = vrcp.pop %v298
      %v534 = vmul.f32 %v298, %v533
      %v535 = vsub.f32 1.0, %v534
      %v536 = vmul.f32 %v533, %v535
      %v537 = vadd.f32 %v533, %v536
      %vm538 = vweird.f32 %v298
      %vm539 = vweird.f32 %v533
      %vm540 = vmor %vm538, %vm539
      %v541 = vsel %vm540, %v533, %v537
      %v542 = vand.u32 2147483647, %v298
      %vm543 = vcmp.eq.f32.partialorder %v542, 8.507059e+37
      %v544 = vand.u32 %v298, 2147483648
      %v545 = vor.u32 1.1754944e-38, %v544
      %v546 = vsel %vm543, %v545, %v541
      %v547 = vmul.f32 %v254, %v546
      %v548 = vrcp.pop %v299
      %v549 = vmul.f32 %v299, %v548
      %v550 = vsub.f32 1.0, %v549
      %v551 = vmul.f32 %v548, %v550
      %v552 = vadd.f32 %v548, %v551
      %vm553 = vweird.f32 %v299
      %vm554 = vweird.f32 %v548
      %vm555 = vmor %vm553, %vm554
      %v556 = vsel %vm555, %v548, %v552
      %v557 = vand.u32 2147483647, %v299
      %vm558 = vcmp.eq.f32.partialorder %v557, 8.507059e+37
      %v559 = vand.u32 %v299, 2147483648
      %v560 = vor.u32 1.1754944e-38, %v559
      %v561 = vsel %vm558, %v560, %v556
      %v562 = vmul.f32 %v257, %v561
      %v563 = vrcp.pop %v300
      %v564 = vmul.f32 %v300, %v563
      %v565 = vsub.f32 1.0, %v564
      %v566 = vmul.f32 %v563, %v565
      %v567 = vadd.f32 %v563, %v566
      %vm568 = vweird.f32 %v300
      %vm569 = vweird.f32 %v563
      %vm570 = vmor %vm568, %vm569
      %v571 = vsel %vm570, %v563, %v567
      %v572 = vand.u32 2147483647, %v300
      %vm573 = vcmp.eq.f32.partialorder %v572, 8.507059e+37
      %v574 = vand.u32 %v300, 2147483648
      %v575 = vor.u32 1.1754944e-38, %v574
      %v576 = vsel %vm573, %v575, %v571
      %v577 = vmul.f32 %v260, %v576
      %v578 = vrcp.pop %v301
      %v579 = vmul.f32 %v301, %v578
      %v580 = vsub.f32 1.0, %v579
      %v581 = vmul.f32 %v578, %v580
      %v582 = vadd.f32 %v578, %v581
      %vm583 = vweird.f32 %v301
      %vm584 = vweird.f32 %v578
      %vm585 = vmor %vm583, %vm584
      %v586 = vsel %vm585, %v578, %v582
      %v587 = vand.u32 2147483647, %v301
      %vm588 = vcmp.eq.f32.partialorder %v587, 8.507059e+37
      %v589 = vand.u32 %v301, 2147483648
      %v590 = vor.u32 1.1754944e-38, %v589
      %v591 = vsel %vm588, %v590, %v586
      %v592 = vmul.f32 %v263, %v591
      %v593 = vrcp.pop %v302
      %v594 = vmul.f32 %v302, %v593
      %v595 = vsub.f32 1.0, %v594
      %v596 = vmul.f32 %v593, %v595
      %v597 = vadd.f32 %v593, %v596
      %vm598 = vweird.f32 %v302
      %vm599 = vweird.f32 %v593
      %vm600 = vmor %vm598, %vm599
      %v601 = vsel %vm600, %v593, %v597
      %v602 = vand.u32 2147483647, %v302
      %vm603 = vcmp.eq.f32.partialorder %v602, 8.507059e+37
      %v604 = vand.u32 %v302, 2147483648
      %v605 = vor.u32 1.1754944e-38, %v604
      %v606 = vsel %vm603, %v605, %v601
      %v607 = vmul.f32 %v266, %v606
      %v608 = vrcp.pop %v303
      %v609 = vmul.f32 %v303, %v608
      %v610 = vsub.f32 1.0, %v609
      %v611 = vmul.f32 %v608, %v610
      %v612 = vadd.f32 %v608, %v611
      %vm613 = vweird.f32 %v303
      %vm614 = vweird.f32 %v608
      %vm615 = vmor %vm613, %vm614
      %v616 = vsel %vm615, %v608, %v612
      %v617 = vand.u32 2147483647, %v303
      %vm618 = vcmp.eq.f32.partialorder %v617, 8.507059e+37
      %v619 = vand.u32 %v303, 2147483648
      %v620 = vor.u32 1.1754944e-38, %v619
      %v621 = vsel %vm618, %v620, %v616
      %v622 = vmul.f32 %v269, %v621
      %v623 = vrcp.pop %v304
      %v624 = vmul.f32 %v304, %v623
      %v625 = vsub.f32 1.0, %v624
      %v626 = vmul.f32 %v623, %v625
      %v627 = vadd.f32 %v623, %v626
      %vm628 = vweird.f32 %v304
      %vm629 = vweird.f32 %v623
      %vm630 = vmor %vm628, %vm629
      %v631 = vsel %vm630, %v623, %v627
      %v632 = vand.u32 2147483647, %v304
      %vm633 = vcmp.eq.f32.partialorder %v632, 8.507059e+37
      %v634 = vand.u32 %v304, 2147483648
      %v635 = vor.u32 1.1754944e-38, %v634
      %v636 = vsel %vm633, %v635, %v631
      %v637 = vmul.f32 %v272, %v636
      %v638 = vrcp.pop %v305
      %v639 = vmul.f32 %v305, %v638
      %v640 = vsub.f32 1.0, %v639
      %v641 = vmul.f32 %v638, %v640
      %v642 = vadd.f32 %v638, %v641
      %vm643 = vweird.f32 %v305
      %vm644 = vweird.f32 %v638
      %vm645 = vmor %vm643, %vm644
      %v646 = vsel %vm645, %v638, %v642
      %v647 = vand.u32 2147483647, %v305
      %vm648 = vcmp.eq.f32.partialorder %v647, 8.507059e+37
      %v649 = vand.u32 %v305, 2147483648
      %v650 = vor.u32 1.1754944e-38, %v649
      %v651 = vsel %vm648, %v650, %v646
      %v652 = vmul.f32 %v275, %v651
      %v653 = vrcp.pop %v306
      %v654 = vmul.f32 %v306, %v653
      %v655 = vsub.f32 1.0, %v654
      %v656 = vmul.f32 %v653, %v655
      %v657 = vadd.f32 %v653, %v656
      %vm658 = vweird.f32 %v306
      %vm659 = vweird.f32 %v653
      %vm660 = vmor %vm658, %vm659
      %v661 = vsel %vm660, %v653, %v657
      %v662 = vand.u32 2147483647, %v306
      %vm663 = vcmp.eq.f32.partialorder %v662, 8.507059e+37
      %v664 = vand.u32 %v306, 2147483648
      %v665 = vor.u32 1.1754944e-38, %v664
      %v666 = vsel %vm663, %v665, %v661
      %v667 = vmul.f32 %v278, %v666
      %v668 = vrcp.pop %v307
      %v669 = vmul.f32 %v307, %v668
      %v670 = vsub.f32 1.0, %v669
      %v671 = vmul.f32 %v668, %v670
      %v672 = vadd.f32 %v668, %v671
      %vm673 = vweird.f32 %v307
      %vm674 = vweird.f32 %v668
      %vm675 = vmor %vm673, %vm674
      %v676 = vsel %vm675, %v668, %v672
      %v677 = vand.u32 2147483647, %v307
      %vm678 = vcmp.eq.f32.partialorder %v677, 8.507059e+37
      %v679 = vand.u32 %v307, 2147483648
      %v680 = vor.u32 1.1754944e-38, %v679
      %v681 = vsel %vm678, %v680, %v676
      %v682 = vmul.f32 %v282, %v681
      %v683 = vrsqrt.pop %v209
      %v684 = vmul.f32 %v683, %v209
      %v685 = vmul.f32 %v684, %v683
      %v686 = vmul.f32 0.5, %v685
      %v687 = vsub.f32 1.5, %v686
      %v688 = vmul.f32 %v683, %v687
      %v689 = vmul.f32 %v209, %v688
      %vm690 = vcmp.eq.f32.partialorder %v209, inf
      %v691 = vsel %vm690, %v209, %v689
      %vm692 = vcmp.eq.f32.partialorder %v209, 0.0
      %v693 = vand.u32 %v209, 2147483648
      %v694 = vsel %vm692, %v693, %v691
      %v695 = vrsqrt.pop %v212
      %v696 = vmul.f32 %v695, %v212
      %v697 = vmul.f32 %v696, %v695
      %v698 = vmul.f32 0.5, %v697
      %v699 = vsub.f32 1.5, %v698
      %v700 = vmul.f32 %v695, %v699
      %v701 = vmul.f32 %v212, %v700
      %vm702 = vcmp.eq.f32.partialorder %v212, inf
      %v703 = vsel %vm702, %v212, %v701
      %vm704 = vcmp.eq.f32.partialorder %v212, 0.0
      %v705 = vand.u32 %v212, 2147483648
      %v706 = vsel %vm704, %v705, %v703
      %v707 = vrsqrt.pop %v215
      %v708 = vmul.f32 %v707, %v215
      %v709 = vmul.f32 %v708, %v707
      %v710 = vmul.f32 0.5, %v709
      %v711 = vsub.f32 1.5, %v710
      %v712 = vmul.f32 %v707, %v711
      %v713 = vmul.f32 %v215, %v712
      %vm714 = vcmp.eq.f32.partialorder %v215, inf
      %v715 = vsel %vm714, %v215, %v713
      %vm716 = vcmp.eq.f32.partialorder %v215, 0.0
      %v717 = vand.u32 %v215, 2147483648
      %v718 = vsel %vm716, %v717, %v715
      %v719 = vrsqrt.pop %v218
      %v720 = vmul.f32 %v719, %v218
      %v721 = vmul.f32 %v720, %v719
      %v722 = vmul.f32 0.5, %v721
      %v723 = vsub.f32 1.5, %v722
      %v724 = vmul.f32 %v719, %v723
      %v725 = vmul.f32 %v218, %v724
      %vm726 = vcmp.eq.f32.partialorder %v218, inf
      %v727 = vsel %vm726, %v218, %v725
      %vm728 = vcmp.eq.f32.partialorder %v218, 0.0
      %v729 = vand.u32 %v218, 2147483648
      %v730 = vsel %vm728, %v729, %v727
      %v731 = vrsqrt.pop %v221
      %v732 = vmul.f32 %v731, %v221
      %v733 = vmul.f32 %v732, %v731
      %v734 = vmul.f32 0.5, %v733
      %v735 = vsub.f32 1.5, %v734
      %v736 = vmul.f32 %v731, %v735
      %v737 = vmul.f32 %v221, %v736
      %vm738 = vcmp.eq.f32.partialorder %v221, inf
      %v739 = vsel %vm738, %v221, %v737
      %vm740 = vcmp.eq.f32.partialorder %v221, 0.0
      %v741 = vand.u32 %v221, 2147483648
      %v742 = vsel %vm740, %v741, %v739
      %v743 = vrsqrt.pop %v224
      %v744 = vmul.f32 %v743, %v224
      %v745 = vmul.f32 %v744, %v743
      %v746 = vmul.f32 0.5, %v745
      %v747 = vsub.f32 1.5, %v746
      %v748 = vmul.f32 %v743, %v747
      %v749 = vmul.f32 %v224, %v748
      %vm750 = vcmp.eq.f32.partialorder %v224, inf
      %v751 = vsel %vm750, %v224, %v749
      %vm752 = vcmp.eq.f32.partialorder %v224, 0.0
      %v753 = vand.u32 %v224, 2147483648
      %v754 = vsel %vm752, %v753, %v751
      %v755 = vrsqrt.pop %v227
      %v756 = vmul.f32 %v755, %v227
      %v757 = vmul.f32 %v756, %v755
      %v758 = vmul.f32 0.5, %v757
      %v759 = vsub.f32 1.5, %v758
      %v760 = vmul.f32 %v755, %v759
      %v761 = vmul.f32 %v227, %v760
      %vm762 = vcmp.eq.f32.partialorder %v227, inf
      %v763 = vsel %vm762, %v227, %v761
      %vm764 = vcmp.eq.f32.partialorder %v227, 0.0
      %v765 = vand.u32 %v227, 2147483648
      %v766 = vsel %vm764, %v765, %v763
      %v767 = vrsqrt.pop %v230
      %v768 = vmul.f32 %v767, %v230
      %v769 = vmul.f32 %v768, %v767
      %v770 = vmul.f32 0.5, %v769
      %v771 = vsub.f32 1.5, %v770
      %v772 = vmul.f32 %v767, %v771
      %v773 = vmul.f32 %v230, %v772
      %vm774 = vcmp.eq.f32.partialorder %v230, inf
      %v775 = vsel %vm774, %v230, %v773
      %vm776 = vcmp.eq.f32.partialorder %v230, 0.0
      %v777 = vand.u32 %v230, 2147483648
      %v778 = vsel %vm776, %v777, %v775
      %v779 = vrsqrt.pop %v233
      %v780 = vmul.f32 %v779, %v233
      %v781 = vmul.f32 %v780, %v779
      %v782 = vmul.f32 0.5, %v781
      %v783 = vsub.f32 1.5, %v782
      %v784 = vmul.f32 %v779, %v783
      %v785 = vmul.f32 %v233, %v784
      %vm786 = vcmp.eq.f32.partialorder %v233, inf
      %v787 = vsel %vm786, %v233, %v785
      %vm788 = vcmp.eq.f32.partialorder %v233, 0.0
      %v789 = vand.u32 %v233, 2147483648
      %v790 = vsel %vm788, %v789, %v787
      %v791 = vrsqrt.pop %v236
      %v792 = vmul.f32 %v791, %v236
      %v793 = vmul.f32 %v792, %v791
      %v794 = vmul.f32 0.5, %v793
      %v795 = vsub.f32 1.5, %v794
      %v796 = vmul.f32 %v791, %v795
      %v797 = vmul.f32 %v236, %v796
      %vm798 = vcmp.eq.f32.partialorder %v236, inf
      %v799 = vsel %vm798, %v236, %v797
      %vm800 = vcmp.eq.f32.partialorder %v236, 0.0
      %v801 = vand.u32 %v236, 2147483648
      %v802 = vsel %vm800, %v801, %v799
      %v803 = vrsqrt.pop %v239
      %v804 = vmul.f32 %v803, %v239
      %v805 = vmul.f32 %v804, %v803
      %v806 = vmul.f32 0.5, %v805
      %v807 = vsub.f32 1.5, %v806
      %v808 = vmul.f32 %v803, %v807
      %v809 = vmul.f32 %v239, %v808
      %vm810 = vcmp.eq.f32.partialorder %v239, inf
      %v811 = vsel %vm810, %v239, %v809
      %vm812 = vcmp.eq.f32.partialorder %v239, 0.0
      %v813 = vand.u32 %v239, 2147483648
      %v814 = vsel %vm812, %v813, %v811
      %v815 = vrsqrt.pop %v242
      %v816 = vmul.f32 %v815, %v242
      %v817 = vmul.f32 %v816, %v815
      %v818 = vmul.f32 0.5, %v817
      %v819 = vsub.f32 1.5, %v818
      %v820 = vmul.f32 %v815, %v819
      %v821 = vmul.f32 %v242, %v820
      %vm822 = vcmp.eq.f32.partialorder %v242, inf
      %v823 = vsel %vm822, %v242, %v821
      %vm824 = vcmp.eq.f32.partialorder %v242, 0.0
      %v825 = vand.u32 %v242, 2147483648
      %v826 = vsel %vm824, %v825, %v823
      %v827 = vrsqrt.pop %v245
      %v828 = vmul.f32 %v827, %v245
      %v829 = vmul.f32 %v828, %v827
      %v830 = vmul.f32 0.5, %v829
      %v831 = vsub.f32 1.5, %v830
      %v832 = vmul.f32 %v827, %v831
      %v833 = vmul.f32 %v245, %v832
      %vm834 = vcmp.eq.f32.partialorder %v245, inf
      %v835 = vsel %vm834, %v245, %v833
      %vm836 = vcmp.eq.f32.partialorder %v245, 0.0
      %v837 = vand.u32 %v245, 2147483648
      %v838 = vsel %vm836, %v837, %v835
      %v839 = vrsqrt.pop %v248
      %v840 = vmul.f32 %v839, %v248
      %v841 = vmul.f32 %v840, %v839
      %v842 = vmul.f32 0.5, %v841
      %v843 = vsub.f32 1.5, %v842
      %v844 = vmul.f32 %v839, %v843
      %v845 = vmul.f32 %v248, %v844
      %vm846 = vcmp.eq.f32.partialorder %v248, inf
      %v847 = vsel %vm846, %v248, %v845
      %vm848 = vcmp.eq.f32.partialorder %v248, 0.0
      %v849 = vand.u32 %v248, 2147483648
      %v850 = vsel %vm848, %v849, %v847
      %v851 = vrsqrt.pop %v251
      %v852 = vmul.f32 %v851, %v251
      %v853 = vmul.f32 %v852, %v851
      %v854 = vmul.f32 0.5, %v853
      %v855 = vsub.f32 1.5, %v854
      %v856 = vmul.f32 %v851, %v855
      %v857 = vmul.f32 %v251, %v856
      %vm858 = vcmp.eq.f32.partialorder %v251, inf
      %v859 = vsel %vm858, %v251, %v857
      %vm860 = vcmp.eq.f32.partialorder %v251, 0.0
      %v861 = vand.u32 %v251, 2147483648
      %v862 = vsel %vm860, %v861, %v859
      %v863 = vrsqrt.pop %v254
      %v864 = vmul.f32 %v863, %v254
      %v865 = vmul.f32 %v864, %v863
      %v866 = vmul.f32 0.5, %v865
      %v867 = vsub.f32 1.5, %v866
      %v868 = vmul.f32 %v863, %v867
      %v869 = vmul.f32 %v254, %v868
      %vm870 = vcmp.eq.f32.partialorder %v254, inf
      %v871 = vsel %vm870, %v254, %v869
      %vm872 = vcmp.eq.f32.partialorder %v254, 0.0
      %v873 = vand.u32 %v254, 2147483648
      %v874 = vsel %vm872, %v873, %v871
      %v875 = vrsqrt.pop %v257
      %v876 = vmul.f32 %v875, %v257
      %v877 = vmul.f32 %v876, %v875
      %v878 = vmul.f32 0.5, %v877
      %v879 = vsub.f32 1.5, %v878
      %v880 = vmul.f32 %v875, %v879
      %v881 = vmul.f32 %v257, %v880
      %vm882 = vcmp.eq.f32.partialorder %v257, inf
      %v883 = vsel %vm882, %v257, %v881
      %vm884 = vcmp.eq.f32.partialorder %v257, 0.0
      %v885 = vand.u32 %v257, 2147483648
      %v886 = vsel %vm884, %v885, %v883
      %v887 = vrsqrt.pop %v260
      %v888 = vmul.f32 %v887, %v260
      %v889 = vmul.f32 %v888, %v887
      %v890 = vmul.f32 0.5, %v889
      %v891 = vsub.f32 1.5, %v890
      %v892 = vmul.f32 %v887, %v891
      %v893 = vmul.f32 %v260, %v892
      %vm894 = vcmp.eq.f32.partialorder %v260, inf
      %v895 = vsel %vm894, %v260, %v893
      %vm896 = vcmp.eq.f32.partialorder %v260, 0.0
      %v897 = vand.u32 %v260, 2147483648
      %v898 = vsel %vm896, %v897, %v895
      %v899 = vrsqrt.pop %v263
      %v900 = vmul.f32 %v899, %v263
      %v901 = vmul.f32 %v900, %v899
      %v902 = vmul.f32 0.5, %v901
      %v903 = vsub.f32 1.5, %v902
      %v904 = vmul.f32 %v899, %v903
      %v905 = vmul.f32 %v263, %v904
      %vm906 = vcmp.eq.f32.partialorder %v263, inf
      %v907 = vsel %vm906, %v263, %v905
      %vm908 = vcmp.eq.f32.partialorder %v263, 0.0
      %v909 = vand.u32 %v263, 2147483648
      %v910 = vsel %vm908, %v909, %v907
      %v911 = vrsqrt.pop %v266
      %v912 = vmul.f32 %v911, %v266
      %v913 = vmul.f32 %v912, %v911
      %v914 = vmul.f32 0.5, %v913
      %v915 = vsub.f32 1.5, %v914
      %v916 = vmul.f32 %v911, %v915
      %v917 = vmul.f32 %v266, %v916
      %vm918 = vcmp.eq.f32.partialorder %v266, inf
      %v919 = vsel %vm918, %v266, %v917
      %vm920 = vcmp.eq.f32.partialorder %v266, 0.0
      %v921 = vand.u32 %v266, 2147483648
      %v922 = vsel %vm920, %v921, %v919
      %v923 = vrsqrt.pop %v269
      %v924 = vmul.f32 %v923, %v269
      %v925 = vmul.f32 %v924, %v923
      %v926 = vmul.f32 0.5, %v925
      %v927 = vsub.f32 1.5, %v926
      %v928 = vmul.f32 %v923, %v927
      %v929 = vmul.f32 %v269, %v928
      %vm930 = vcmp.eq.f32.partialorder %v269, inf
      %v931 = vsel %vm930, %v269, %v929
      %vm932 = vcmp.eq.f32.partialorder %v269, 0.0
      %v933 = vand.u32 %v269, 2147483648
      %v934 = vsel %vm932, %v933, %v931
      %v935 = vrsqrt.pop %v272
      %v936 = vmul.f32 %v935, %v272
      %v937 = vmul.f32 %v936, %v935
      %v938 = vmul.f32 0.5, %v937
      %v939 = vsub.f32 1.5, %v938
      %v940 = vmul.f32 %v935, %v939
      %v941 = vmul.f32 %v272, %v940
      %vm942 = vcmp.eq.f32.partialorder %v272, inf
      %v943 = vsel %vm942, %v272, %v941
      %vm944 = vcmp.eq.f32.partialorder %v272, 0.0
      %v945 = vand.u32 %v272, 2147483648
      %v946 = vsel %vm944, %v945, %v943
      %v947 = vrsqrt.pop %v275
      %v948 = vmul.f32 %v947, %v275
      %v949 = vmul.f32 %v948, %v947
      %v950 = vmul.f32 0.5, %v949
      %v951 = vsub.f32 1.5, %v950
      %v952 = vmul.f32 %v947, %v951
      %v953 = vmul.f32 %v275, %v952
      %vm954 = vcmp.eq.f32.partialorder %v275, inf
      %v955 = vsel %vm954, %v275, %v953
      %vm956 = vcmp.eq.f32.partialorder %v275, 0.0
      %v957 = vand.u32 %v275, 2147483648
      %v958 = vsel %vm956, %v957, %v955
      %v959 = vrsqrt.pop %v278
      %v960 = vmul.f32 %v959, %v278
      %v961 = vmul.f32 %v960, %v959
      %v962 = vmul.f32 0.5, %v961
      %v963 = vsub.f32 1.5, %v962
      %v964 = vmul.f32 %v959, %v963
      %v965 = vmul.f32 %v278, %v964
      %vm966 = vcmp.eq.f32.partialorder %v278, inf
      %v967 = vsel %vm966, %v278, %v965
      %vm968 = vcmp.eq.f32.partialorder %v278, 0.0
      %v969 = vand.u32 %v278, 2147483648
      %v970 = vsel %vm968, %v969, %v967
      %v971 = vrsqrt.pop %v282
      %v972 = vmul.f32 %v971, %v282
      %v973 = vmul.f32 %v972, %v971
      %v974 = vmul.f32 0.5, %v973
      %v975 = vsub.f32 1.5, %v974
      %v976 = vmul.f32 %v971, %v975
      %v977 = vmul.f32 %v282, %v976
      %vm978 = vcmp.eq.f32.partialorder %v282, inf
      %v979 = vsel %vm978, %v282, %v977
      %vm980 = vcmp.eq.f32.partialorder %v282, 0.0
      %v981 = vand.u32 %v282, 2147483648
      %v982 = vsel %vm980, %v981, %v979
      %v983 = vadd.f32 %v694, 1e-08
      %v984 = vadd.f32 %v706, 1e-08
      %v985 = vadd.f32 %v718, 1e-08
      %v986 = vadd.f32 %v730, 1e-08
      %v987 = vadd.f32 %v742, 1e-08
      %v988 = vadd.f32 %v754, 1e-08
      %v989 = vadd.f32 %v766, 1e-08
      %v990 = vadd.f32 %v778, 1e-08
      %v991 = vadd.f32 %v790, 1e-08
      %v992 = vadd.f32 %v802, 1e-08
      %v993 = vadd.f32 %v814, 1e-08
      %v994 = vadd.f32 %v826, 1e-08
      %v995 = vadd.f32 %v838, 1e-08
      %v996 = vadd.f32 %v850, 1e-08
      %v997 = vadd.f32 %v862, 1e-08
      %v998 = vadd.f32 %v874, 1e-08
      %v999 = vadd.f32 %v886, 1e-08
      %v1000 = vadd.f32 %v898, 1e-08
      %v1001 = vadd.f32 %v910, 1e-08
      %v1002 = vadd.f32 %v922, 1e-08
      %v1003 = vadd.f32 %v934, 1e-08
      %v1004 = vadd.f32 %v946, 1e-08
      %v1005 = vadd.f32 %v958, 1e-08
      %v1006 = vadd.f32 %v970, 1e-08
      %v1007 = vadd.f32 %v982, 1e-08
      %v1008 = vrcp.pop %v983
      %v1009 = vmul.f32 %v983, %v1008
      %v1010 = vsub.f32 1.0, %v1009
      %v1011 = vmul.f32 %v1008, %v1010
      %v1012 = vadd.f32 %v1008, %v1011
      %vm1013 = vweird.f32 %v983
      %vm1014 = vweird.f32 %v1008
      %vm1015 = vmor %vm1013, %vm1014
      %v1016 = vsel %vm1015, %v1008, %v1012
      %v1017 = vand.u32 2147483647, %v983
      %vm1018 = vcmp.eq.f32.partialorder %v1017, 8.507059e+37
      %v1019 = vand.u32 %v983, 2147483648
      %v1020 = vor.u32 1.1754944e-38, %v1019
      %v1021 = vsel %vm1018, %v1020, %v1016
      %v1022 = vrcp.pop %v984
      %v1023 = vmul.f32 %v984, %v1022
      %v1024 = vsub.f32 1.0, %v1023
      %v1025 = vmul.f32 %v1022, %v1024
      %v1026 = vadd.f32 %v1022, %v1025
      %vm1027 = vweird.f32 %v984
      %vm1028 = vweird.f32 %v1022
      %vm1029 = vmor %vm1027, %vm1028
      %v1030 = vsel %vm1029, %v1022, %v1026
      %v1031 = vand.u32 2147483647, %v984
      %vm1032 = vcmp.eq.f32.partialorder %v1031, 8.507059e+37
      %v1033 = vand.u32 %v984, 2147483648
      %v1034 = vor.u32 1.1754944e-38, %v1033
      %v1035 = vsel %vm1032, %v1034, %v1030
      %v1036 = vrcp.pop %v985
      %v1037 = vmul.f32 %v985, %v1036
      %v1038 = vsub.f32 1.0, %v1037
      %v1039 = vmul.f32 %v1036, %v1038
      %v1040 = vadd.f32 %v1036, %v1039
      %vm1041 = vweird.f32 %v985
      %vm1042 = vweird.f32 %v1036
      %vm1043 = vmor %vm1041, %vm1042
      %v1044 = vsel %vm1043, %v1036, %v1040
      %v1045 = vand.u32 2147483647, %v985
      %vm1046 = vcmp.eq.f32.partialorder %v1045, 8.507059e+37
      %v1047 = vand.u32 %v985, 2147483648
      %v1048 = vor.u32 1.1754944e-38, %v1047
      %v1049 = vsel %vm1046, %v1048, %v1044
      %v1050 = vrcp.pop %v986
      %v1051 = vmul.f32 %v986, %v1050
      %v1052 = vsub.f32 1.0, %v1051
      %v1053 = vmul.f32 %v1050, %v1052
      %v1054 = vadd.f32 %v1050, %v1053
      %vm1055 = vweird.f32 %v986
      %vm1056 = vweird.f32 %v1050
      %vm1057 = vmor %vm1055, %vm1056
      %v1058 = vsel %vm1057, %v1050, %v1054
      %v1059 = vand.u32 2147483647, %v986
      %vm1060 = vcmp.eq.f32.partialorder %v1059, 8.507059e+37
      %v1061 = vand.u32 %v986, 2147483648
      %v1062 = vor.u32 1.1754944e-38, %v1061
      %v1063 = vsel %vm1060, %v1062, %v1058
      %v1064 = vrcp.pop %v987
      %v1065 = vmul.f32 %v987, %v1064
      %v1066 = vsub.f32 1.0, %v1065
      %v1067 = vmul.f32 %v1064, %v1066
      %v1068 = vadd.f32 %v1064, %v1067
      %vm1069 = vweird.f32 %v987
      %vm1070 = vweird.f32 %v1064
      %vm1071 = vmor %vm1069, %vm1070
      %v1072 = vsel %vm1071, %v1064, %v1068
      %v1073 = vand.u32 2147483647, %v987
      %vm1074 = vcmp.eq.f32.partialorder %v1073, 8.507059e+37
      %v1075 = vand.u32 %v987, 2147483648
      %v1076 = vor.u32 1.1754944e-38, %v1075
      %v1077 = vsel %vm1074, %v1076, %v1072
      %v1078 = vrcp.pop %v988
      %v1079 = vmul.f32 %v988, %v1078
      %v1080 = vsub.f32 1.0, %v1079
      %v1081 = vmul.f32 %v1078, %v1080
      %v1082 = vadd.f32 %v1078, %v1081
      %vm1083 = vweird.f32 %v988
      %vm1084 = vweird.f32 %v1078
      %vm1085 = vmor %vm1083, %vm1084
      %v1086 = vsel %vm1085, %v1078, %v1082
      %v1087 = vand.u32 2147483647, %v988
      %vm1088 = vcmp.eq.f32.partialorder %v1087, 8.507059e+37
      %v1089 = vand.u32 %v988, 2147483648
      %v1090 = vor.u32 1.1754944e-38, %v1089
      %v1091 = vsel %vm1088, %v1090, %v1086
      %v1092 = vrcp.pop %v989
      %v1093 = vmul.f32 %v989, %v1092
      %v1094 = vsub.f32 1.0, %v1093
      %v1095 = vmul.f32 %v1092, %v1094
      %v1096 = vadd.f32 %v1092, %v1095
      %vm1097 = vweird.f32 %v989
      %vm1098 = vweird.f32 %v1092
      %vm1099 = vmor %vm1097, %vm1098
      %v1100 = vsel %vm1099, %v1092, %v1096
      %v1101 = vand.u32 2147483647, %v989
      %vm1102 = vcmp.eq.f32.partialorder %v1101, 8.507059e+37
      %v1103 = vand.u32 %v989, 2147483648
      %v1104 = vor.u32 1.1754944e-38, %v1103
      %v1105 = vsel %vm1102, %v1104, %v1100
      %v1106 = vrcp.pop %v990
      %v1107 = vmul.f32 %v990, %v1106
      %v1108 = vsub.f32 1.0, %v1107
      %v1109 = vmul.f32 %v1106, %v1108
      %v1110 = vadd.f32 %v1106, %v1109
      %vm1111 = vweird.f32 %v990
      %vm1112 = vweird.f32 %v1106
      %vm1113 = vmor %vm1111, %vm1112
      %v1114 = vsel %vm1113, %v1106, %v1110
      %v1115 = vand.u32 2147483647, %v990
      %vm1116 = vcmp.eq.f32.partialorder %v1115, 8.507059e+37
      %v1117 = vand.u32 %v990, 2147483648
      %v1118 = vor.u32 1.1754944e-38, %v1117
      %v1119 = vsel %vm1116, %v1118, %v1114
      %v1120 = vrcp.pop %v991
      %v1121 = vmul.f32 %v991, %v1120
      %v1122 = vsub.f32 1.0, %v1121
      %v1123 = vmul.f32 %v1120, %v1122
      %v1124 = vadd.f32 %v1120, %v1123
      %vm1125 = vweird.f32 %v991
      %vm1126 = vweird.f32 %v1120
      %vm1127 = vmor %vm1125, %vm1126
      %v1128 = vsel %vm1127, %v1120, %v1124
      %v1129 = vand.u32 2147483647, %v991
      %vm1130 = vcmp.eq.f32.partialorder %v1129, 8.507059e+37
      %v1131 = vand.u32 %v991, 2147483648
      %v1132 = vor.u32 1.1754944e-38, %v1131
      %v1133 = vsel %vm1130, %v1132, %v1128
      %v1134 = vrcp.pop %v992
      %v1135 = vmul.f32 %v992, %v1134
      %v1136 = vsub.f32 1.0, %v1135
      %v1137 = vmul.f32 %v1134, %v1136
      %v1138 = vadd.f32 %v1134, %v1137
      %vm1139 = vweird.f32 %v992
      %vm1140 = vweird.f32 %v1134
      %vm1141 = vmor %vm1139, %vm1140
      %v1142 = vsel %vm1141, %v1134, %v1138
      %v1143 = vand.u32 2147483647, %v992
      %vm1144 = vcmp.eq.f32.partialorder %v1143, 8.507059e+37
      %v1145 = vand.u32 %v992, 2147483648
      %v1146 = vor.u32 1.1754944e-38, %v1145
      %v1147 = vsel %vm1144, %v1146, %v1142
      %v1148 = vrcp.pop %v993
      %v1149 = vmul.f32 %v993, %v1148
      %v1150 = vsub.f32 1.0, %v1149
      %v1151 = vmul.f32 %v1148, %v1150
      %v1152 = vadd.f32 %v1148, %v1151
      %vm1153 = vweird.f32 %v993
      %vm1154 = vweird.f32 %v1148
      %vm1155 = vmor %vm1153, %vm1154
      %v1156 = vsel %vm1155, %v1148, %v1152
      %v1157 = vand.u32 2147483647, %v993
      %vm1158 = vcmp.eq.f32.partialorder %v1157, 8.507059e+37
      %v1159 = vand.u32 %v993, 2147483648
      %v1160 = vor.u32 1.1754944e-38, %v1159
      %v1161 = vsel %vm1158, %v1160, %v1156
      %v1162 = vrcp.pop %v994
      %v1163 = vmul.f32 %v994, %v1162
      %v1164 = vsub.f32 1.0, %v1163
      %v1165 = vmul.f32 %v1162, %v1164
      %v1166 = vadd.f32 %v1162, %v1165
      %vm1167 = vweird.f32 %v994
      %vm1168 = vweird.f32 %v1162
      %vm1169 = vmor %vm1167, %vm1168
      %v1170 = vsel %vm1169, %v1162, %v1166
      %v1171 = vand.u32 2147483647, %v994
      %vm1172 = vcmp.eq.f32.partialorder %v1171, 8.507059e+37
      %v1173 = vand.u32 %v994, 2147483648
      %v1174 = vor.u32 1.1754944e-38, %v1173
      %v1175 = vsel %vm1172, %v1174, %v1170
      %v1176 = vrcp.pop %v995
      %v1177 = vmul.f32 %v995, %v1176
      %v1178 = vsub.f32 1.0, %v1177
      %v1179 = vmul.f32 %v1176, %v1178
      %v1180 = vadd.f32 %v1176, %v1179
      %vm1181 = vweird.f32 %v995
      %vm1182 = vweird.f32 %v1176
      %vm1183 = vmor %vm1181, %vm1182
      %v1184 = vsel %vm1183, %v1176, %v1180
      %v1185 = vand.u32 2147483647, %v995
      %vm1186 = vcmp.eq.f32.partialorder %v1185, 8.507059e+37
      %v1187 = vand.u32 %v995, 2147483648
      %v1188 = vor.u32 1.1754944e-38, %v1187
      %v1189 = vsel %vm1186, %v1188, %v1184
      %v1190 = vrcp.pop %v996
      %v1191 = vmul.f32 %v996, %v1190
      %v1192 = vsub.f32 1.0, %v1191
      %v1193 = vmul.f32 %v1190, %v1192
      %v1194 = vadd.f32 %v1190, %v1193
      %vm1195 = vweird.f32 %v996
      %vm1196 = vweird.f32 %v1190
      %vm1197 = vmor %vm1195, %vm1196
      %v1198 = vsel %vm1197, %v1190, %v1194
      %v1199 = vand.u32 2147483647, %v996
      %vm1200 = vcmp.eq.f32.partialorder %v1199, 8.507059e+37
      %v1201 = vand.u32 %v996, 2147483648
      %v1202 = vor.u32 1.1754944e-38, %v1201
      %v1203 = vsel %vm1200, %v1202, %v1198
      %v1204 = vrcp.pop %v997
      %v1205 = vmul.f32 %v997, %v1204
      %v1206 = vsub.f32 1.0, %v1205
      %v1207 = vmul.f32 %v1204, %v1206
      %v1208 = vadd.f32 %v1204, %v1207
      %vm1209 = vweird.f32 %v997
      %vm1210 = vweird.f32 %v1204
      %vm1211 = vmor %vm1209, %vm1210
      %v1212 = vsel %vm1211, %v1204, %v1208
      %v1213 = vand.u32 2147483647, %v997
      %vm1214 = vcmp.eq.f32.partialorder %v1213, 8.507059e+37
      %v1215 = vand.u32 %v997, 2147483648
      %v1216 = vor.u32 1.1754944e-38, %v1215
      %v1217 = vsel %vm1214, %v1216, %v1212
      %v1218 = vrcp.pop %v998
      %v1219 = vmul.f32 %v998, %v1218
      %v1220 = vsub.f32 1.0, %v1219
      %v1221 = vmul.f32 %v1218, %v1220
      %v1222 = vadd.f32 %v1218, %v1221
      %vm1223 = vweird.f32 %v998
      %vm1224 = vweird.f32 %v1218
      %vm1225 = vmor %vm1223, %vm1224
      %v1226 = vsel %vm1225, %v1218, %v1222
      %v1227 = vand.u32 2147483647, %v998
      %vm1228 = vcmp.eq.f32.partialorder %v1227, 8.507059e+37
      %v1229 = vand.u32 %v998, 2147483648
      %v1230 = vor.u32 1.1754944e-38, %v1229
      %v1231 = vsel %vm1228, %v1230, %v1226
      %v1232 = vrcp.pop %v999
      %v1233 = vmul.f32 %v999, %v1232
      %v1234 = vsub.f32 1.0, %v1233
      %v1235 = vmul.f32 %v1232, %v1234
      %v1236 = vadd.f32 %v1232, %v1235
      %vm1237 = vweird.f32 %v999
      %vm1238 = vweird.f32 %v1232
      %vm1239 = vmor %vm1237, %vm1238
      %v1240 = vsel %vm1239, %v1232, %v1236
      %v1241 = vand.u32 2147483647, %v999
      %vm1242 = vcmp.eq.f32.partialorder %v1241, 8.507059e+37
      %v1243 = vand.u32 %v999, 2147483648
      %v1244 = vor.u32 1.1754944e-38, %v1243
      %v1245 = vsel %vm1242, %v1244, %v1240
      %v1246 = vrcp.pop %v1000
      %v1247 = vmul.f32 %v1000, %v1246
      %v1248 = vsub.f32 1.0, %v1247
      %v1249 = vmul.f32 %v1246, %v1248
      %v1250 = vadd.f32 %v1246, %v1249
      %vm1251 = vweird.f32 %v1000
      %vm1252 = vweird.f32 %v1246
      %vm1253 = vmor %vm1251, %vm1252
      %v1254 = vsel %vm1253, %v1246, %v1250
      %v1255 = vand.u32 2147483647, %v1000
      %vm1256 = vcmp.eq.f32.partialorder %v1255, 8.507059e+37
      %v1257 = vand.u32 %v1000, 2147483648
      %v1258 = vor.u32 1.1754944e-38, %v1257
      %v1259 = vsel %vm1256, %v1258, %v1254
      %v1260 = vrcp.pop %v1001
      %v1261 = vmul.f32 %v1001, %v1260
      %v1262 = vsub.f32 1.0, %v1261
      %v1263 = vmul.f32 %v1260, %v1262
      %v1264 = vadd.f32 %v1260, %v1263
      %vm1265 = vweird.f32 %v1001
      %vm1266 = vweird.f32 %v1260
      %vm1267 = vmor %vm1265, %vm1266
      %v1268 = vsel %vm1267, %v1260, %v1264
      %v1269 = vand.u32 2147483647, %v1001
      %vm1270 = vcmp.eq.f32.partialorder %v1269, 8.507059e+37
      %v1271 = vand.u32 %v1001, 2147483648
      %v1272 = vor.u32 1.1754944e-38, %v1271
      %v1273 = vsel %vm1270, %v1272, %v1268
      %v1274 = vrcp.pop %v1002
      %v1275 = vmul.f32 %v1002, %v1274
      %v1276 = vsub.f32 1.0, %v1275
      %v1277 = vmul.f32 %v1274, %v1276
      %v1278 = vadd.f32 %v1274, %v1277
      %vm1279 = vweird.f32 %v1002
      %vm1280 = vweird.f32 %v1274
      %vm1281 = vmor %vm1279, %vm1280
      %v1282 = vsel %vm1281, %v1274, %v1278
      %v1283 = vand.u32 2147483647, %v1002
      %vm1284 = vcmp.eq.f32.partialorder %v1283, 8.507059e+37
      %v1285 = vand.u32 %v1002, 2147483648
      %v1286 = vor.u32 1.1754944e-38, %v1285
      %v1287 = vsel %vm1284, %v1286, %v1282
      %v1288 = vrcp.pop %v1003
      %v1289 = vmul.f32 %v1003, %v1288
      %v1290 = vsub.f32 1.0, %v1289
      %v1291 = vmul.f32 %v1288, %v1290
      %v1292 = vadd.f32 %v1288, %v1291
      %vm1293 = vweird.f32 %v1003
      %vm1294 = vweird.f32 %v1288
      %vm1295 = vmor %vm1293, %vm1294
      %v1296 = vsel %vm1295, %v1288, %v1292
      %v1297 = vand.u32 2147483647, %v1003
      %vm1298 = vcmp.eq.f32.partialorder %v1297, 8.507059e+37
      %v1299 = vand.u32 %v1003, 2147483648
      %v1300 = vor.u32 1.1754944e-38, %v1299
      %v1301 = vsel %vm1298, %v1300, %v1296
      %v1302 = vrcp.pop %v1004
      %v1303 = vmul.f32 %v1004, %v1302
      %v1304 = vsub.f32 1.0, %v1303
      %v1305 = vmul.f32 %v1302, %v1304
      %v1306 = vadd.f32 %v1302, %v1305
      %vm1307 = vweird.f32 %v1004
      %vm1308 = vweird.f32 %v1302
      %vm1309 = vmor %vm1307, %vm1308
      %v1310 = vsel %vm1309, %v1302, %v1306
      %v1311 = vand.u32 2147483647, %v1004
      %vm1312 = vcmp.eq.f32.partialorder %v1311, 8.507059e+37
      %v1313 = vand.u32 %v1004, 2147483648
      %v1314 = vor.u32 1.1754944e-38, %v1313
      %v1315 = vsel %vm1312, %v1314, %v1310
      %v1316 = vrcp.pop %v1005
      %v1317 = vmul.f32 %v1005, %v1316
      %v1318 = vsub.f32 1.0, %v1317
      %v1319 = vmul.f32 %v1316, %v1318
      %v1320 = vadd.f32 %v1316, %v1319
      %vm1321 = vweird.f32 %v1005
      %vm1322 = vweird.f32 %v1316
      %vm1323 = vmor %vm1321, %vm1322
      %v1324 = vsel %vm1323, %v1316, %v1320
      %v1325 = vand.u32 2147483647, %v1005
      %vm1326 = vcmp.eq.f32.partialorder %v1325, 8.507059e+37
      %v1327 = vand.u32 %v1005, 2147483648
      %v1328 = vor.u32 1.1754944e-38, %v1327
      %v1329 = vsel %vm1326, %v1328, %v1324
      %v1330 = vrcp.pop %v1006
      %v1331 = vmul.f32 %v1006, %v1330
      %v1332 = vsub.f32 1.0, %v1331
      %v1333 = vmul.f32 %v1330, %v1332
      %v1334 = vadd.f32 %v1330, %v1333
      %vm1335 = vweird.f32 %v1006
      %vm1336 = vweird.f32 %v1330
      %vm1337 = vmor %vm1335, %vm1336
      %v1338 = vsel %vm1337, %v1330, %v1334
      %v1339 = vand.u32 2147483647, %v1006
      %vm1340 = vcmp.eq.f32.partialorder %v1339, 8.507059e+37
      %v1341 = vand.u32 %v1006, 2147483648
      %v1342 = vor.u32 1.1754944e-38, %v1341
      %v1343 = vsel %vm1340, %v1342, %v1338
      %v1344 = vrcp.pop %v1007
      %v1345 = vmul.f32 %v1007, %v1344
      %v1346 = vsub.f32 1.0, %v1345
      %v1347 = vmul.f32 %v1344, %v1346
      %v1348 = vadd.f32 %v1344, %v1347
      %vm1349 = vweird.f32 %v1007
      %vm1350 = vweird.f32 %v1344
      %vm1351 = vmor %vm1349, %vm1350
      %v1352 = vsel %vm1351, %v1344, %v1348
      %v1353 = vand.u32 2147483647, %v1007
      %vm1354 = vcmp.eq.f32.partialorder %v1353, 8.507059e+37
      %v1355 = vand.u32 %v1007, 2147483648
      %v1356 = vor.u32 1.1754944e-38, %v1355
      %v1357 = vsel %vm1354, %v1356, %v1352
      %v1358 = vmul.f32 %v322, %v156
      %v1359 = vmul.f32 %v337, %v157
      %v1360 = vmul.f32 %v352, %v158
      %v1361 = vmul.f32 %v367, %v159
      %v1362 = vmul.f32 %v382, %v160
      %v1363 = vmul.f32 %v397, %v161
      %v1364 = vmul.f32 %v412, %v162
      %v1365 = vmul.f32 %v427, %v163
      %v1366 = vmul.f32 %v442, %v164
      %v1367 = vmul.f32 %v457, %v165
      %v1368 = vmul.f32 %v472, %v166
      %v1369 = vmul.f32 %v487, %v167
      %v1370 = vmul.f32 %v502, %v168
      %v1371 = vmul.f32 %v517, %v169
      %v1372 = vmul.f32 %v532, %v170
      %v1373 = vmul.f32 %v547, %v171
      %v1374 = vmul.f32 %v562, %v172
      %v1375 = vmul.f32 %v577, %v173
      %v1376 = vmul.f32 %v592, %v174
      %v1377 = vmul.f32 %v607, %v175
      %v1378 = vmul.f32 %v622, %v176
      %v1379 = vmul.f32 %v637, %v177
      %v1380 = vmul.f32 %v652, %v178
      %v1381 = vmul.f32 %v667, %v179
      %v1382 = vmul.f32 %v682, %v180
      %v1383 = vmul.f32 %v1358, %v1021
      %v1384 = vmul.f32 %v1359, %v1035
      %v1385 = vmul.f32 %v1360, %v1049
      %v1386 = vmul.f32 %v1361, %v1063
      %v1387 = vmul.f32 %v1362, %v1077
      %v1388 = vmul.f32 %v1363, %v1091
      %v1389 = vmul.f32 %v1364, %v1105
      %v1390 = vmul.f32 %v1365, %v1119
      %v1391 = vmul.f32 %v1366, %v1133
      %v1392 = vmul.f32 %v1367, %v1147
      %v1393 = vmul.f32 %v1368, %v1161
      %v1394 = vmul.f32 %v1369, %v1175
      %v1395 = vmul.f32 %v1370, %v1189
      %v1396 = vmul.f32 %v1371, %v1203
      %v1397 = vmul.f32 %v1372, %v1217
      %v1398 = vmul.f32 %v1373, %v1231
      %v1399 = vmul.f32 %v1374, %v1245
      %v1400 = vmul.f32 %v1375, %v1259
      %v1401 = vmul.f32 %v1376, %v1273
      %v1402 = vmul.f32 %v1377, %v1287
      %v1403 = vmul.f32 %v1378, %v1301
      %v1404 = vmul.f32 %v1379, %v1315
      %v1405 = vmul.f32 %v1380, %v1329
      %v1406 = vmul.f32 %v1381, %v1343
      %v1407 = vmul.f32 %v1382, %v1357
      %1408 = vst.msk [vmem:[%s154] sm:$0xff] %vm206, %v1383
      %1409 = vst.msk [vmem:[%s154 + $0x8] sm:$0xff] %vm206, %v1384
      %1410 = vst.msk [vmem:[%s154 + $0x10] sm:$0xff] %vm206, %v1385
      %1411 = vst.msk [vmem:[%s154 + $0x18] sm:$0xff] %vm206, %v1386
      %1412 = vst.msk [vmem:[%s154 + $0x20] sm:$0xff] %vm206, %v1387
      %1413 = vst.msk [vmem:[%s154 + $0x28] sm:$0xff] %vm206, %v1388
      %1414 = vst.msk [vmem:[%s154 + $0x30] sm:$0xff] %vm206, %v1389
      %1415 = vst.msk [vmem:[%s154 + $0x38] sm:$0xff] %vm206, %v1390
      %1416 = vst.msk [vmem:[%s154 + $0x40] sm:$0xff] %vm206, %v1391
      %1417 = vst.msk [vmem:[%s154 + $0x48] sm:$0xff] %vm206, %v1392
      %1418 = vst.msk [vmem:[%s154 + $0x50] sm:$0xff] %vm206, %v1393
      %1419 = vst.msk [vmem:[%s154 + $0x58] sm:$0xff] %vm206, %v1394
      %1420 = vst.msk [vmem:[%s154 + $0x60] sm:$0xff] %vm206, %v1395
      %1421 = vst.msk [vmem:[%s154 + $0x68] sm:$0xff] %vm206, %v1396
      %1422 = vst.msk [vmem:[%s154 + $0x70] sm:$0xff] %vm206, %v1397
      %1423 = vst.msk [vmem:[%s154 + $0x78] sm:$0xff] %vm206, %v1398
      %1424 = vst.msk [vmem:[%s154 + $0x80] sm:$0xff] %vm206, %v1399
      %1425 = vst.msk [vmem:[%s154 + $0x88] sm:$0xff] %vm206, %v1400
      %1426 = vst.msk [vmem:[%s154 + $0x90] sm:$0xff] %vm206, %v1401
      %1427 = vst.msk [vmem:[%s154 + $0x98] sm:$0xff] %vm206, %v1402
      %1428 = vst.msk [vmem:[%s154 + $0xa0] sm:$0xff] %vm206, %v1403
      %1429 = vst.msk [vmem:[%s154 + $0xa8] sm:$0xff] %vm206, %v1404
      %1430 = vst.msk [vmem:[%s154 + $0xb0] sm:$0xff] %vm206, %v1405
      %1431 = vst.msk [vmem:[%s154 + $0xb8] sm:$0xff] %vm206, %v1406
      %1432 = vst.msk [vmem:[%s154 + $0xc0] sm:$0xf] %vm279, %v1407
      %s1433 = smul.u32 25, %s17
      %p1434 = scmp.lt.s32.totalorder %s16, 1
      %s1435 = scalar_select %p1434, %s16, 1
      %p1436 = scmp.lt.s32.totalorder %s1433, 24
      %s1437 = scalar_select %p1436, %s1433, 24
      %s1438 = smul.addr %s1435, 25
      %s1439 = sadd.s32 %s1437, %s1438
      %s1440 = smul.addr %s1439, 8
      %s1441 = scalar_lea.vmem %s1, %s1440
      // Predicated region
      $region25: #{primary_caps_forward.3} parent=23 // pred_check
        %p1442 = pneg %p72
      $region26: #{primary_caps_forward.3} parent=23 // pred_check_branch
        %1444 = sbr.rel (%p1442) target = $region28
      $region27: #{primary_caps_forward.3} parent=23 // pred_region
        %s1445 = smul.u32 25, %s17
      $region28: #{primary_caps_forward.3} parent=23 // pred_fallthru
        _
    $region24: #{primary_caps_forward.3} parent=5 // pred_fallthru
      _
    %p1446 = scmp.le.s32.totalorder 2, %s7
    // Predicated region
    $region29: #{primary_caps_forward.3} parent=5 // pred_check
      %p1447 = pneg %p1446
    $region30: #{primary_caps_forward.3} parent=5 // pred_check_branch
      %1449 = sbr.rel (%p1447) target = $region32
    $region31: #{primary_caps_forward.3} parent=5 // pred_region
      %s1450 = ssub.s32 %s7, 2
      // Predicated region
      $region33: #{primary_caps_forward.3} parent=31 // pred_check
        %p1451 = pneg %p78
      $region34: #{primary_caps_forward.3} parent=31 // pred_check_branch
        %1453 = sbr.rel (%p1451) target = $region36
      $region35: #{primary_caps_forward.3} parent=31 // pred_region
        %s1454 = smul.u32 25, %s19
        %p1455 = scmp.lt.s32.totalorder %s18, 1
        %s1456 = scalar_select %p1455, %s18, 1
        %p1457 = scmp.lt.s32.totalorder %s1454, 24
        %s1458 = scalar_select %p1457, %s1454, 24
        %s1459 = smul.addr %s1456, 25
        %s1460 = sadd.s32 %s1458, %s1459
        %s1461 = smul.addr %s1460, 8
        %s1462 = scalar_lea.vmem %s1, %s1461
      $region36: #{primary_caps_forward.3} parent=31 // pred_fallthru
        _
    $region32: #{primary_caps_forward.3} parent=5 // pred_fallthru
      _
  $region6: #{primary_caps_forward.3} parent=0 // loop_footer
    %s11 = sadd.s32 1, %s7
  $region7: #{primary_caps_forward.3} parent=0 // loop_footer_branch
    %6 = sbr.rel target = $region3
  $region8: #{primary_caps_forward.3} parent=0 // loop_exit
    _

</llo_original>
